<compile_context>
chip_gen: v7x
topology: tpu7x:2x2x1
jax: 0.10.0
libtpu: 0.0.40
codegen_flags: <defaults>
</compile_context>

<pallas_src>
import functools
import math

import jax
import jax.numpy as jnp
from jax.experimental import pallas as pl
from jax.experimental.pallas import tpu as pltpu


# ----------------------------- Pallas kernel ------------------------------ #
def _decoder_block_kernel(
    x_ref,        # (B*S, E)   activations, batch folded into rows
    ln1_g_ref,    # (1, E)
    ln1_b_ref,    # (1, E)
    wqkv_ref,     # (E, 3E)    block-diagonal fused QKV (scale folded into Q)
    wo_ref,       # (E, E)     output projection, (in, out) layout
    ln2_g_ref,    # (1, E)
    ln2_b_ref,    # (1, E)
    w1_ref,       # (E, 4E)
    b1_ref,       # (1, 4E)
    w2_ref,       # (4E, E)
    b2_ref,       # (1, E)
    bias_ref,     # (S, S)     additive causal bias: 0 on/below diag, -1e30 above
    o_ref,        # (B*S, E)
    attn_sc,      # VMEM scratch (B, S, E): per-head outputs, no concat needed
    *,
    batch: int,
    seq: int,
    num_heads: int,
):
    B, S, H = batch, seq, num_heads
    rows, E = x_ref.shape
    hd = E // H
    eps = 1e-5

    def layernorm(v, g, b):
        mean = jnp.mean(v, axis=-1, keepdims=True)
        var = jnp.mean((v - mean) ** 2, axis=-1, keepdims=True)
        return (v - mean) * jax.lax.rsqrt(var + eps) * g + b

    x = x_ref[...]                                            # (B*S, E)
    x_ln = layernorm(x, ln1_g_ref[...], ln1_b_ref[...])       # (B*S, E)

    # ---- Fused QKV projection: one wide MXU matmul for all heads ----
    qkv = jnp.dot(x_ln, wqkv_ref[...],
                  preferred_element_type=jnp.float32)         # (B*S, 3E)
    qkv3 = qkv.reshape(B, S, 3 * E)   # split leading dim (8-sublane aligned)

    bias = bias_ref[...]                                      # (S, S)

    # ---- Multi-head causal self-attention (scores/softmax/AV batched over B) ----
    for h in range(H):                                        # static unroll
        q_h = qkv3[:, :, h * hd:(h + 1) * hd]                 # (B, S, hd)
        k_h = qkv3[:, :, E + h * hd:E + (h + 1) * hd]
        v_h = qkv3[:, :, 2 * E + h * hd:2 * E + (h + 1) * hd]

        s = jnp.einsum('bqd,bkd->bqk', q_h, k_h,
                       preferred_element_type=jnp.float32)    # (B, S, S)
        s = s + bias                      # scale already folded into Wq block

        m = jnp.max(s, axis=-1, keepdims=True)
        e = jnp.exp(s - m)
        l = jnp.sum(e, axis=-1, keepdims=True)                # (B, S, 1)
        o_un = jnp.einsum('bqk,bkd->bqd', e, v_h,
                          preferred_element_type=jnp.float32)  # (B, S, hd)
        # Deferred normalization: tiny (B,S,1) reciprocal + (B,S,hd) multiply.
        # (approx=False keeps the exact-divide numerics for the 1e-4 check.)
        attn_sc[:, :, h * hd:(h + 1) * hd] = o_un * pl.reciprocal(l, approx=False)
        # TODO(synk): dropout omitted (eval-mode identity; torch RNG not reproducible)

    attn = attn_sc[...].reshape(B * S, E)                     # merge leading dims
    ctx = jnp.dot(attn, wo_ref[...], preferred_element_type=jnp.float32)

    # ---- residual (to post-LN1 x, matching the torch module) + LayerNorm 2 ----
    updated = x_ln + ctx
    updated = layernorm(updated, ln2_g_ref[...], ln2_b_ref[...])

    # ---- FeedForward: Linear -> tanh-GELU -> Linear, residual to post-LN2 ----
    h1 = jnp.dot(updated, w1_ref[...],
                 preferred_element_type=jnp.float32) + b1_ref[...]
    h1 = jax.nn.gelu(h1, approximate=True)
    ff = jnp.dot(h1, w2_ref[...],
                 preferred_element_type=jnp.float32) + b2_ref[...]

    o_ref[...] = ff + updated


# ------------------------------ host wrapper ------------------------------ #
def decoder_block(x, params, *, num_heads: int):
    B, S, E = x.shape
    hd = E // num_heads
    I = 4 * E

    # --- host-side (free, one-time) weight packing ---
    def block_diag(w):  # (H, hd, hd) -> block-diagonal (E, E), (in, out) layout
        out = jnp.zeros((E, E), w.dtype)
        for h in range(num_heads):
            out = out.at[h * hd:(h + 1) * hd, h * hd:(h + 1) * hd].set(w[h])
        return out

    scale = 1.0 / math.sqrt(hd)
    w_qkv = jnp.concatenate(
        [block_diag(params["wq"]) * scale,     # fold 1/sqrt(hd) into Q block
         block_diag(params["wk"]),
         block_diag(params["wv"])], axis=1)    # (E, 3E)

    causal = jnp.tril(jnp.ones((S, S), dtype=bool))
    attn_bias = jnp.where(causal, 0.0, -1e30).astype(jnp.float32)   # (S, S)

    x2d = x.reshape(B * S, E)                  # fold batch into rows (host-side)

    vmem_spec = pl.BlockSpec(memory_space=pltpu.MemorySpace.VMEM)
    kernel = functools.partial(_decoder_block_kernel,
                               batch=B, seq=S, num_heads=num_heads)

    out2d = pl.pallas_call(
        kernel,
        out_shape=jax.ShapeDtypeStruct((B * S, E), jnp.float32),
        in_specs=[vmem_spec] * 12,             # whole problem (<1 MB) is VMEM-resident
        out_specs=vmem_spec,
        scratch_shapes=[pltpu.VMEM((B, S, E), jnp.float32)],
    )(
        x2d,
        params["ln1_g"], params["ln1_b"],
        w_qkv, params["wo"],
        params["ln2_g"], params["ln2_b"],
        params["w1"], params["b1"], params["w2"], params["b2"],
        attn_bias,
    )
    return out2d.reshape(B, S, E)


# --------------------------- pure-JAX reference ---------------------------- #
def decoder_block_ref(x, params, *, num_heads: int):
    B, S, E = x.shape
    hd = E // num_heads

    def layernorm(v, g, b):
        mean = jnp.mean(v, axis=-1, keepdims=True)
        var = jnp.mean((v - mean) ** 2, axis=-1, keepdims=True)
        return (v - mean) / jnp.sqrt(var + 1e-5) * g + b

    x_ln = layernorm(x, params["ln1_g"][0], params["ln1_b"][0])
    causal = jnp.tril(jnp.ones((S, S), dtype=bool))
    outs = []
    for h in range(num_heads):
        xh = x_ln[:, :, h * hd:(h + 1) * hd]
        q = xh @ params["wq"][h]
        k = xh @ params["wk"][h]
        v = xh @ params["wv"][h]
        sc = (q @ jnp.swapaxes(k, -1, -2)) / math.sqrt(hd)
        sc = jnp.where(causal[None], sc, -jnp.inf)
        attn = jax.nn.softmax(sc, axis=-1)
        outs.append(attn @ v)
    ctx = jnp.concatenate(outs, axis=-1) @ params["wo"]
    upd = layernorm(x_ln + ctx, params["ln2_g"][0], params["ln2_b"][0])
    h1 = jax.nn.gelu(upd @ params["w1"] + params["b1"][0], approximate=True)
    ff = h1 @ params["w2"] + params["b2"][0]
    return ff + upd


# ---------------------------------- main ----------------------------------- #
if __name__ == "__main__":
    B, S, E, H = 2, 8, 32, 4       # batch, max_sequence_length, embedding, heads
    hd = E // H
    I = 4 * E

    key = jax.random.PRNGKey(0)
    keys = jax.random.split(key, 10)

    # Deterministic synthetic parameters (all float32, (in, out) layout).
    params = {
        "ln1_g": jnp.ones((1, E), jnp.float32),
        "ln1_b": jnp.zeros((1, E), jnp.float32),
        "wq": jax.random.normal(keys[0], (H, hd, hd), jnp.float32) * 0.1,
        "wk": jax.random.normal(keys[1], (H, hd, hd), jnp.float32) * 0.1,
        "wv": jax.random.normal(keys[2], (H, hd, hd), jnp.float32) * 0.1,
        "wo": jax.random.normal(keys[3], (E, E), jnp.float32) * 0.1,
        "ln2_g": jnp.ones((1, E), jnp.float32),
        "ln2_b": jnp.zeros((1, E), jnp.float32),
        "w1": jax.random.normal(keys[4], (E, I), jnp.float32) * 0.1,
        "b1": jax.random.normal(keys[5], (1, I), jnp.float32) * 0.1,
        "w2": jax.random.normal(keys[6], (I, E), jnp.float32) * 0.1,
        "b2": jax.random.normal(keys[7], (1, E), jnp.float32) * 0.1,
    }

    x = jax.random.normal(keys[8], (B, S, E), jnp.float32)

    out = decoder_block(x, params, num_heads=H)
    out = jax.block_until_ready(out)

    ref = decoder_block_ref(x, params, num_heads=H)
    assert out.shape == (B, S, E)
    assert jnp.allclose(out, ref, atol=1e-4, rtol=1e-4), "mismatch vs reference"

    print("KERNEL_OK")
</pallas_src>

<mosaic_0001>
module attributes {stable_mosaic.version = 11 : i64} {
  func.func @_decoder_block_kernel(%arg0: memref<16x32xf32, #tpu.memory_space<vmem>>, %arg1: memref<1x32xf32, #tpu.memory_space<vmem>>, %arg2: memref<1x32xf32, #tpu.memory_space<vmem>>, %arg3: memref<32x96xf32, #tpu.memory_space<vmem>>, %arg4: memref<32x32xf32, #tpu.memory_space<vmem>>, %arg5: memref<1x32xf32, #tpu.memory_space<vmem>>, %arg6: memref<1x32xf32, #tpu.memory_space<vmem>>, %arg7: memref<32x128xf32, #tpu.memory_space<vmem>>, %arg8: memref<1x128xf32, #tpu.memory_space<vmem>>, %arg9: memref<128x32xf32, #tpu.memory_space<vmem>>, %arg10: memref<1x32xf32, #tpu.memory_space<vmem>>, %arg11: memref<8x8xf32, #tpu.memory_space<vmem>>, %arg12: memref<16x32xf32, #tpu.memory_space<vmem>>, %arg13: memref<2x8x32xf32, #tpu.memory_space<vmem>>) attributes {dimension_semantics = [], scalar_prefetch = 0 : i64, scratch_operands = 1 : i64, tpu.core_type = #tpu.core_type<tc>} {
    %c0 = arith.constant 0 : index
    %c0_0 = arith.constant 0 : index
    %0 = vector.load %arg0[%c0, %c0_0] : memref<16x32xf32, #tpu.memory_space<vmem>>, vector<16x32xf32>
    %c0_1 = arith.constant 0 : index
    %c0_2 = arith.constant 0 : index
    %1 = vector.load %arg1[%c0_1, %c0_2] : memref<1x32xf32, #tpu.memory_space<vmem>>, vector<1x32xf32>
    %c0_3 = arith.constant 0 : index
    %c0_4 = arith.constant 0 : index
    %2 = vector.load %arg2[%c0_3, %c0_4] : memref<1x32xf32, #tpu.memory_space<vmem>>, vector<1x32xf32>
    %cst = arith.constant dense<0.000000e+00> : vector<16xf32>
    %3 = vector.multi_reduction <add>, %0, %cst [1] : vector<16x32xf32> to vector<16xf32>
    %4 = vector.shape_cast %3 : vector<16xf32> to vector<16x1xf32>
    %cst_5 = arith.constant 3.200000e+01 : f32
    %5 = vector.broadcast %cst_5 : f32 to vector<16x1xf32>
    %6 = arith.divf %4, %5 : vector<16x1xf32>
    %7 = vector.broadcast %6 : vector<16x1xf32> to vector<16x32xf32>
    %8 = arith.subf %0, %7 : vector<16x32xf32>
    %9 = arith.mulf %8, %8 : vector<16x32xf32>
    %cst_6 = arith.constant dense<0.000000e+00> : vector<16xf32>
    %10 = vector.multi_reduction <add>, %9, %cst_6 [1] : vector<16x32xf32> to vector<16xf32>
    %11 = vector.shape_cast %10 : vector<16xf32> to vector<16x1xf32>
    %cst_7 = arith.constant 3.200000e+01 : f32
    %12 = vector.broadcast %cst_7 : f32 to vector<16x1xf32>
    %13 = arith.divf %11, %12 : vector<16x1xf32>
    %14 = vector.broadcast %6 : vector<16x1xf32> to vector<16x32xf32>
    %15 = arith.subf %0, %14 : vector<16x32xf32>
    %cst_8 = arith.constant 9.99999974E-6 : f32
    %16 = vector.broadcast %cst_8 : f32 to vector<16x1xf32>
    %17 = arith.addf %13, %16 : vector<16x1xf32>
    %18 = math.rsqrt %17 : vector<16x1xf32>
    %19 = vector.broadcast %18 : vector<16x1xf32> to vector<16x32xf32>
    %20 = arith.mulf %15, %19 : vector<16x32xf32>
    %21 = vector.broadcast %1 : vector<1x32xf32> to vector<16x32xf32>
    %22 = arith.mulf %20, %21 : vector<16x32xf32>
    %23 = vector.broadcast %2 : vector<1x32xf32> to vector<16x32xf32>
    %24 = arith.addf %22, %23 : vector<16x32xf32>
    %c0_9 = arith.constant 0 : index
    %c0_10 = arith.constant 0 : index
    %25 = vector.load %arg3[%c0_9, %c0_10] : memref<32x96xf32, #tpu.memory_space<vmem>>, vector<32x96xf32>
    %cst_11 = arith.constant dense<0.000000e+00> : vector<16x96xf32>
    %26 = tpu.matmul %24, %25, %cst_11 {dimension_numbers = #tpu.dot_dimension_numbers<[1], [0], [0], [1], [0, 0, 1, 1], [], []>} : vector<16x32xf32>, vector<32x96xf32>, vector<16x96xf32> -> vector<16x96xf32>
    %27 = vector.shape_cast %26 : vector<16x96xf32> to vector<2x8x96xf32>
    %c0_12 = arith.constant 0 : index
    %c0_13 = arith.constant 0 : index
    %28 = vector.load %arg11[%c0_12, %c0_13] : memref<8x8xf32, #tpu.memory_space<vmem>>, vector<8x8xf32>
    %29 = vector.extract_strided_slice %27 {offsets = [0, 0, 0], sizes = [2, 8, 8], strides = [1, 1, 1]} : vector<2x8x96xf32> to vector<2x8x8xf32>
    %30 = vector.extract_strided_slice %27 {offsets = [0, 0, 32], sizes = [2, 8, 8], strides = [1, 1, 1]} : vector<2x8x96xf32> to vector<2x8x8xf32>
    %31 = vector.extract_strided_slice %27 {offsets = [0, 0, 64], sizes = [2, 8, 8], strides = [1, 1, 1]} : vector<2x8x96xf32> to vector<2x8x8xf32>
    "tpu.trace_start"() <{level = 10 : i32, message = "bqd,bkd->bqk"}> : () -> ()
    %cst_14 = arith.constant dense<0.000000e+00> : vector<2x8x8xf32>
    %32 = tpu.matmul %29, %30, %cst_14 {dimension_numbers = #tpu.dot_dimension_numbers<[2], [2], [1], [1], [0, 0, 0, 1, 1, 1], [0], [0]>} : vector<2x8x8xf32>, vector<2x8x8xf32>, vector<2x8x8xf32> -> vector<2x8x8xf32>
    "tpu.trace_stop"() : () -> ()
    %33 = vector.shape_cast %28 : vector<8x8xf32> to vector<1x8x8xf32>
    %34 = vector.broadcast %33 : vector<1x8x8xf32> to vector<2x8x8xf32>
    %35 = arith.addf %32, %34 : vector<2x8x8xf32>
    %cst_15 = arith.constant dense<0xFF800000> : vector<2x8xf32>
    %36 = vector.multi_reduction <maximumf>, %35, %cst_15 [2] : vector<2x8x8xf32> to vector<2x8xf32>
    %37 = vector.shape_cast %36 : vector<2x8xf32> to vector<2x8x1xf32>
    %38 = vector.broadcast %37 : vector<2x8x1xf32> to vector<2x8x8xf32>
    %39 = arith.subf %35, %38 : vector<2x8x8xf32>
    %40 = math.exp %39 : vector<2x8x8xf32>
    %cst_16 = arith.constant dense<0.000000e+00> : vector<2x8xf32>
    %41 = vector.multi_reduction <add>, %40, %cst_16 [2] : vector<2x8x8xf32> to vector<2x8xf32>
    %42 = vector.shape_cast %41 : vector<2x8xf32> to vector<2x8x1xf32>
    "tpu.trace_start"() <{level = 10 : i32, message = "bqk,bkd->bqd"}> : () -> ()
    %cst_17 = arith.constant dense<0.000000e+00> : vector<2x8x8xf32>
    %43 = tpu.matmul %40, %31, %cst_17 {dimension_numbers = #tpu.dot_dimension_numbers<[2], [1], [1], [2], [0, 0, 0, 1, 1, 2], [0], [0]>} : vector<2x8x8xf32>, vector<2x8x8xf32>, vector<2x8x8xf32> -> vector<2x8x8xf32>
    "tpu.trace_stop"() : () -> ()
    %44 = tpu.reciprocal %42 : vector<2x8x1xf32> -> vector<2x8x1xf32>
    %45 = vector.broadcast %44 : vector<2x8x1xf32> to vector<2x8x8xf32>
    %46 = arith.mulf %43, %45 : vector<2x8x8xf32>
    %c0_18 = arith.constant 0 : index
    %c0_19 = arith.constant 0 : index
    %c0_20 = arith.constant 0 : index
    %47 = vector.load %arg13[%c0_18, %c0_19, %c0_20] : memref<2x8x32xf32, #tpu.memory_space<vmem>>, vector<2x8x8xf32>
    tpu.vector_store %arg13[%c0_18, %c0_19, %c0_20], %46 {strides = array<i32>} : memref<2x8x32xf32, #tpu.memory_space<vmem>>, vector<2x8x8xf32>,
    %48 = vector.extract_strided_slice %27 {offsets = [0, 0, 8], sizes = [2, 8, 8], strides = [1, 1, 1]} : vector<2x8x96xf32> to vector<2x8x8xf32>
    %49 = vector.extract_strided_slice %27 {offsets = [0, 0, 40], sizes = [2, 8, 8], strides = [1, 1, 1]} : vector<2x8x96xf32> to vector<2x8x8xf32>
    %50 = vector.extract_strided_slice %27 {offsets = [0, 0, 72], sizes = [2, 8, 8], strides = [1, 1, 1]} : vector<2x8x96xf32> to vector<2x8x8xf32>
    "tpu.trace_start"() <{level = 10 : i32, message = "bqd,bkd->bqk"}> : () -> ()
    %cst_21 = arith.constant dense<0.000000e+00> : vector<2x8x8xf32>
    %51 = tpu.matmul %48, %49, %cst_21 {dimension_numbers = #tpu.dot_dimension_numbers<[2], [2], [1], [1], [0, 0, 0, 1, 1, 1], [0], [0]>} : vector<2x8x8xf32>, vector<2x8x8xf32>, vector<2x8x8xf32> -> vector<2x8x8xf32>
    "tpu.trace_stop"() : () -> ()
    %52 = vector.shape_cast %28 : vector<8x8xf32> to vector<1x8x8xf32>
    %53 = vector.broadcast %52 : vector<1x8x8xf32> to vector<2x8x8xf32>
    %54 = arith.addf %51, %53 : vector<2x8x8xf32>
    %cst_22 = arith.constant dense<0xFF800000> : vector<2x8xf32>
    %55 = vector.multi_reduction <maximumf>, %54, %cst_22 [2] : vector<2x8x8xf32> to vector<2x8xf32>
    %56 = vector.shape_cast %55 : vector<2x8xf32> to vector<2x8x1xf32>
    %57 = vector.broadcast %56 : vector<2x8x1xf32> to vector<2x8x8xf32>
    %58 = arith.subf %54, %57 : vector<2x8x8xf32>
    %59 = math.exp %58 : vector<2x8x8xf32>
    %cst_23 = arith.constant dense<0.000000e+00> : vector<2x8xf32>
    %60 = vector.multi_reduction <add>, %59, %cst_23 [2] : vector<2x8x8xf32> to vector<2x8xf32>
    %61 = vector.shape_cast %60 : vector<2x8xf32> to vector<2x8x1xf32>
    "tpu.trace_start"() <{level = 10 : i32, message = "bqk,bkd->bqd"}> : () -> ()
    %cst_24 = arith.constant dense<0.000000e+00> : vector<2x8x8xf32>
    %62 = tpu.matmul %59, %50, %cst_24 {dimension_numbers = #tpu.dot_dimension_numbers<[2], [1], [1], [2], [0, 0, 0, 1, 1, 2], [0], [0]>} : vector<2x8x8xf32>, vector<2x8x8xf32>, vector<2x8x8xf32> -> vector<2x8x8xf32>
    "tpu.trace_stop"() : () -> ()
    %63 = tpu.reciprocal %61 : vector<2x8x1xf32> -> vector<2x8x1xf32>
    %64 = vector.broadcast %63 : vector<2x8x1xf32> to vector<2x8x8xf32>
    %65 = arith.mulf %62, %64 : vector<2x8x8xf32>
    %c0_25 = arith.constant 0 : index
    %c0_26 = arith.constant 0 : index
    %c8 = arith.constant 8 : index
    %66 = vector.load %arg13[%c0_25, %c0_26, %c8] : memref<2x8x32xf32, #tpu.memory_space<vmem>>, vector<2x8x8xf32>
    tpu.vector_store %arg13[%c0_25, %c0_26, %c8], %65 {strides = array<i32>} : memref<2x8x32xf32, #tpu.memory_space<vmem>>, vector<2x8x8xf32>,
    %67 = vector.extract_strided_slice %27 {offsets = [0, 0, 16], sizes = [2, 8, 8], strides = [1, 1, 1]} : vector<2x8x96xf32> to vector<2x8x8xf32>
    %68 = vector.extract_strided_slice %27 {offsets = [0, 0, 48], sizes = [2, 8, 8], strides = [1, 1, 1]} : vector<2x8x96xf32> to vector<2x8x8xf32>
    %69 = vector.extract_strided_slice %27 {offsets = [0, 0, 80], sizes = [2, 8, 8], strides = [1, 1, 1]} : vector<2x8x96xf32> to vector<2x8x8xf32>
    "tpu.trace_start"() <{level = 10 : i32, message = "bqd,bkd->bqk"}> : () -> ()
    %cst_27 = arith.constant dense<0.000000e+00> : vector<2x8x8xf32>
    %70 = tpu.matmul %67, %68, %cst_27 {dimension_numbers = #tpu.dot_dimension_numbers<[2], [2], [1], [1], [0, 0, 0, 1, 1, 1], [0], [0]>} : vector<2x8x8xf32>, vector<2x8x8xf32>, vector<2x8x8xf32> -> vector<2x8x8xf32>
    "tpu.trace_stop"() : () -> ()
    %71 = vector.shape_cast %28 : vector<8x8xf32> to vector<1x8x8xf32>
    %72 = vector.broadcast %71 : vector<1x8x8xf32> to vector<2x8x8xf32>
    %73 = arith.addf %70, %72 : vector<2x8x8xf32>
    %cst_28 = arith.constant dense<0xFF800000> : vector<2x8xf32>
    %74 = vector.multi_reduction <maximumf>, %73, %cst_28 [2] : vector<2x8x8xf32> to vector<2x8xf32>
    %75 = vector.shape_cast %74 : vector<2x8xf32> to vector<2x8x1xf32>
    %76 = vector.broadcast %75 : vector<2x8x1xf32> to vector<2x8x8xf32>
    %77 = arith.subf %73, %76 : vector<2x8x8xf32>
    %78 = math.exp %77 : vector<2x8x8xf32>
    %cst_29 = arith.constant dense<0.000000e+00> : vector<2x8xf32>
    %79 = vector.multi_reduction <add>, %78, %cst_29 [2] : vector<2x8x8xf32> to vector<2x8xf32>
    %80 = vector.shape_cast %79 : vector<2x8xf32> to vector<2x8x1xf32>
    "tpu.trace_start"() <{level = 10 : i32, message = "bqk,bkd->bqd"}> : () -> ()
    %cst_30 = arith.constant dense<0.000000e+00> : vector<2x8x8xf32>
    %81 = tpu.matmul %78, %69, %cst_30 {dimension_numbers = #tpu.dot_dimension_numbers<[2], [1], [1], [2], [0, 0, 0, 1, 1, 2], [0], [0]>} : vector<2x8x8xf32>, vector<2x8x8xf32>, vector<2x8x8xf32> -> vector<2x8x8xf32>
    "tpu.trace_stop"() : () -> ()
    %82 = tpu.reciprocal %80 : vector<2x8x1xf32> -> vector<2x8x1xf32>
    %83 = vector.broadcast %82 : vector<2x8x1xf32> to vector<2x8x8xf32>
    %84 = arith.mulf %81, %83 : vector<2x8x8xf32>
    %c0_31 = arith.constant 0 : index
    %c0_32 = arith.constant 0 : index
    %c16 = arith.constant 16 : index
    %85 = vector.load %arg13[%c0_31, %c0_32, %c16] : memref<2x8x32xf32, #tpu.memory_space<vmem>>, vector<2x8x8xf32>
    tpu.vector_store %arg13[%c0_31, %c0_32, %c16], %84 {strides = array<i32>} : memref<2x8x32xf32, #tpu.memory_space<vmem>>, vector<2x8x8xf32>,
    %86 = vector.extract_strided_slice %27 {offsets = [0, 0, 24], sizes = [2, 8, 8], strides = [1, 1, 1]} : vector<2x8x96xf32> to vector<2x8x8xf32>
    %87 = vector.extract_strided_slice %27 {offsets = [0, 0, 56], sizes = [2, 8, 8], strides = [1, 1, 1]} : vector<2x8x96xf32> to vector<2x8x8xf32>
    %88 = vector.extract_strided_slice %27 {offsets = [0, 0, 88], sizes = [2, 8, 8], strides = [1, 1, 1]} : vector<2x8x96xf32> to vector<2x8x8xf32>
    "tpu.trace_start"() <{level = 10 : i32, message = "bqd,bkd->bqk"}> : () -> ()
    %cst_33 = arith.constant dense<0.000000e+00> : vector<2x8x8xf32>
    %89 = tpu.matmul %86, %87, %cst_33 {dimension_numbers = #tpu.dot_dimension_numbers<[2], [2], [1], [1], [0, 0, 0, 1, 1, 1], [0], [0]>} : vector<2x8x8xf32>, vector<2x8x8xf32>, vector<2x8x8xf32> -> vector<2x8x8xf32>
    "tpu.trace_stop"() : () -> ()
    %90 = vector.shape_cast %28 : vector<8x8xf32> to vector<1x8x8xf32>
    %91 = vector.broadcast %90 : vector<1x8x8xf32> to vector<2x8x8xf32>
    %92 = arith.addf %89, %91 : vector<2x8x8xf32>
    %cst_34 = arith.constant dense<0xFF800000> : vector<2x8xf32>
    %93 = vector.multi_reduction <maximumf>, %92, %cst_34 [2] : vector<2x8x8xf32> to vector<2x8xf32>
    %94 = vector.shape_cast %93 : vector<2x8xf32> to vector<2x8x1xf32>
    %95 = vector.broadcast %94 : vector<2x8x1xf32> to vector<2x8x8xf32>
    %96 = arith.subf %92, %95 : vector<2x8x8xf32>
    %97 = math.exp %96 : vector<2x8x8xf32>
    %cst_35 = arith.constant dense<0.000000e+00> : vector<2x8xf32>
    %98 = vector.multi_reduction <add>, %97, %cst_35 [2] : vector<2x8x8xf32> to vector<2x8xf32>
    %99 = vector.shape_cast %98 : vector<2x8xf32> to vector<2x8x1xf32>
    "tpu.trace_start"() <{level = 10 : i32, message = "bqk,bkd->bqd"}> : () -> ()
    %cst_36 = arith.constant dense<0.000000e+00> : vector<2x8x8xf32>
    %100 = tpu.matmul %97, %88, %cst_36 {dimension_numbers = #tpu.dot_dimension_numbers<[2], [1], [1], [2], [0, 0, 0, 1, 1, 2], [0], [0]>} : vector<2x8x8xf32>, vector<2x8x8xf32>, vector<2x8x8xf32> -> vector<2x8x8xf32>
    "tpu.trace_stop"() : () -> ()
    %101 = tpu.reciprocal %99 : vector<2x8x1xf32> -> vector<2x8x1xf32>
    %102 = vector.broadcast %101 : vector<2x8x1xf32> to vector<2x8x8xf32>
    %103 = arith.mulf %100, %102 : vector<2x8x8xf32>
    %c0_37 = arith.constant 0 : index
    %c0_38 = arith.constant 0 : index
    %c24 = arith.constant 24 : index
    %104 = vector.load %arg13[%c0_37, %c0_38, %c24] : memref<2x8x32xf32, #tpu.memory_space<vmem>>, vector<2x8x8xf32>
    tpu.vector_store %arg13[%c0_37, %c0_38, %c24], %103 {strides = array<i32>} : memref<2x8x32xf32, #tpu.memory_space<vmem>>, vector<2x8x8xf32>,
    %c0_39 = arith.constant 0 : index
    %c0_40 = arith.constant 0 : index
    %c0_41 = arith.constant 0 : index
    %105 = vector.load %arg13[%c0_39, %c0_40, %c0_41] : memref<2x8x32xf32, #tpu.memory_space<vmem>>, vector<2x8x32xf32>
    %106 = vector.shape_cast %105 : vector<2x8x32xf32> to vector<16x32xf32>
    %c0_42 = arith.constant 0 : index
    %c0_43 = arith.constant 0 : index
    %107 = vector.load %arg4[%c0_42, %c0_43] : memref<32x32xf32, #tpu.memory_space<vmem>>, vector<32x32xf32>
    %cst_44 = arith.constant dense<0.000000e+00> : vector<16x32xf32>
    %108 = tpu.matmul %106, %107, %cst_44 {dimension_numbers = #tpu.dot_dimension_numbers<[1], [0], [0], [1], [0, 0, 1, 1], [], []>} : vector<16x32xf32>, vector<32x32xf32>, vector<16x32xf32> -> vector<16x32xf32>
    %109 = arith.addf %24, %108 : vector<16x32xf32>
    %c0_45 = arith.constant 0 : index
    %c0_46 = arith.constant 0 : index
    %110 = vector.load %arg5[%c0_45, %c0_46] : memref<1x32xf32, #tpu.memory_space<vmem>>, vector<1x32xf32>
    %c0_47 = arith.constant 0 : index
    %c0_48 = arith.constant 0 : index
    %111 = vector.load %arg6[%c0_47, %c0_48] : memref<1x32xf32, #tpu.memory_space<vmem>>, vector<1x32xf32>
    %cst_49 = arith.constant dense<0.000000e+00> : vector<16xf32>
    %112 = vector.multi_reduction <add>, %109, %cst_49 [1] : vector<16x32xf32> to vector<16xf32>
    %113 = vector.shape_cast %112 : vector<16xf32> to vector<16x1xf32>
    %cst_50 = arith.constant 3.200000e+01 : f32
    %114 = vector.broadcast %cst_50 : f32 to vector<16x1xf32>
    %115 = arith.divf %113, %114 : vector<16x1xf32>
    %116 = vector.broadcast %115 : vector<16x1xf32> to vector<16x32xf32>
    %117 = arith.subf %109, %116 : vector<16x32xf32>
    %118 = arith.mulf %117, %117 : vector<16x32xf32>
    %cst_51 = arith.constant dense<0.000000e+00> : vector<16xf32>
    %119 = vector.multi_reduction <add>, %118, %cst_51 [1] : vector<16x32xf32> to vector<16xf32>
    %120 = vector.shape_cast %119 : vector<16xf32> to vector<16x1xf32>
    %cst_52 = arith.constant 3.200000e+01 : f32
    %121 = vector.broadcast %cst_52 : f32 to vector<16x1xf32>
    %122 = arith.divf %120, %121 : vector<16x1xf32>
    %123 = vector.broadcast %115 : vector<16x1xf32> to vector<16x32xf32>
    %124 = arith.subf %109, %123 : vector<16x32xf32>
    %cst_53 = arith.constant 9.99999974E-6 : f32
    %125 = vector.broadcast %cst_53 : f32 to vector<16x1xf32>
    %126 = arith.addf %122, %125 : vector<16x1xf32>
    %127 = math.rsqrt %126 : vector<16x1xf32>
    %128 = vector.broadcast %127 : vector<16x1xf32> to vector<16x32xf32>
    %129 = arith.mulf %124, %128 : vector<16x32xf32>
    %130 = vector.broadcast %110 : vector<1x32xf32> to vector<16x32xf32>
    %131 = arith.mulf %129, %130 : vector<16x32xf32>
    %132 = vector.broadcast %111 : vector<1x32xf32> to vector<16x32xf32>
    %133 = arith.addf %131, %132 : vector<16x32xf32>
    %c0_54 = arith.constant 0 : index
    %c0_55 = arith.constant 0 : index
    %134 = vector.load %arg7[%c0_54, %c0_55] : memref<32x128xf32, #tpu.memory_space<vmem>>, vector<32x128xf32>
    %cst_56 = arith.constant dense<0.000000e+00> : vector<16x128xf32>
    %135 = tpu.matmul %133, %134, %cst_56 {dimension_numbers = #tpu.dot_dimension_numbers<[1], [0], [0], [1], [0, 0, 1, 1], [], []>} : vector<16x32xf32>, vector<32x128xf32>, vector<16x128xf32> -> vector<16x128xf32>
    %c0_57 = arith.constant 0 : index
    %c0_58 = arith.constant 0 : index
    %136 = vector.load %arg8[%c0_57, %c0_58] : memref<1x128xf32, #tpu.memory_space<vmem>>, vector<1x128xf32>
    %137 = vector.broadcast %136 : vector<1x128xf32> to vector<16x128xf32>
    %138 = arith.addf %135, %137 : vector<16x128xf32>
    %139 = arith.mulf %138, %138 : vector<16x128xf32>
    %140 = arith.mulf %138, %139 : vector<16x128xf32>
    %cst_59 = arith.constant 4.471500e-02 : f32
    %141 = vector.broadcast %cst_59 : f32 to vector<16x128xf32>
    %142 = arith.mulf %141, %140 : vector<16x128xf32>
    %143 = arith.addf %138, %142 : vector<16x128xf32>
    %cst_60 = arith.constant 0.797884583 : f32
    %144 = vector.broadcast %cst_60 : f32 to vector<16x128xf32>
    %145 = arith.mulf %144, %143 : vector<16x128xf32>
    %146 = math.tanh %145 : vector<16x128xf32>
    %cst_61 = arith.constant 1.000000e+00 : f32
    %147 = vector.broadcast %cst_61 : f32 to vector<16x128xf32>
    %148 = arith.addf %147, %146 : vector<16x128xf32>
    %cst_62 = arith.constant 5.000000e-01 : f32
    %149 = vector.broadcast %cst_62 : f32 to vector<16x128xf32>
    %150 = arith.mulf %149, %148 : vector<16x128xf32>
    %151 = arith.mulf %138, %150 : vector<16x128xf32>
    %c0_63 = arith.constant 0 : index
    %c0_64 = arith.constant 0 : index
    %152 = vector.load %arg9[%c0_63, %c0_64] : memref<128x32xf32, #tpu.memory_space<vmem>>, vector<128x32xf32>
    %cst_65 = arith.constant dense<0.000000e+00> : vector<16x32xf32>
    %153 = tpu.matmul %151, %152, %cst_65 {dimension_numbers = #tpu.dot_dimension_numbers<[1], [0], [0], [1], [0, 0, 1, 1], [], []>} : vector<16x128xf32>, vector<128x32xf32>, vector<16x32xf32> -> vector<16x32xf32>
    %c0_66 = arith.constant 0 : index
    %c0_67 = arith.constant 0 : index
    %154 = vector.load %arg10[%c0_66, %c0_67] : memref<1x32xf32, #tpu.memory_space<vmem>>, vector<1x32xf32>
    %155 = vector.broadcast %154 : vector<1x32xf32> to vector<16x32xf32>
    %156 = arith.addf %153, %155 : vector<16x32xf32>
    %157 = arith.addf %156, %133 : vector<16x32xf32>
    %c0_68 = arith.constant 0 : index
    %c0_69 = arith.constant 0 : index
    %158 = vector.load %arg12[%c0_68, %c0_69] : memref<16x32xf32, #tpu.memory_space<vmem>>, vector<16x32xf32>
    tpu.vector_store %arg12[%c0_68, %c0_69], %157 {strides = array<i32>} : memref<16x32xf32, #tpu.memory_space<vmem>>, vector<16x32xf32>,
    return
  }
}

</mosaic_0001>

<llo_original>
// kernel: tpu_custom_call.1
$region0: #{tpu_custom_call.1}
  #allocation0 [shape = 'u32[]', space=smem, size = 0x4, offset = 0x4, fixed_abs, tag = 'smem constant byte address 0x4 - core index']
  #allocation1 [shape = 'u32[144,128]{1,0:T(1,128)}', space=vmem, size = 0x12000, scoped, tag = 'internal scratch']
  #allocation2 [shape = 'f32[2,8,32]{2,1,0:T(8,128)}', space=vmem, size = 0x2000, scoped, tag = 'scratch operand']
  %s0 = inlined_call_operand.vmem [shape: f32[16,32], index: 0, kind: input, shape index: {}]
  %s1 = inlined_call_operand.vmem [shape: f32[1,32], index: 1, kind: input, shape index: {}]
  %s2 = inlined_call_operand.vmem [shape: f32[1,32], index: 2, kind: input, shape index: {}]
  %s3 = inlined_call_operand.vmem [shape: f32[32,96], index: 3, kind: input, shape index: {}]
  %s4 = inlined_call_operand.vmem [shape: f32[32,32], index: 4, kind: input, shape index: {}]
  %s5 = inlined_call_operand.vmem [shape: f32[1,32], index: 5, kind: input, shape index: {}]
  %s6 = inlined_call_operand.vmem [shape: f32[1,32], index: 6, kind: input, shape index: {}]
  %s7 = inlined_call_operand.vmem [shape: f32[32,128], index: 7, kind: input, shape index: {}]
  %s8 = inlined_call_operand.vmem [shape: f32[1,128], index: 8, kind: input, shape index: {}]
  %s9 = inlined_call_operand.vmem [shape: f32[128,32], index: 9, kind: input, shape index: {}]
  %s10 = inlined_call_operand.vmem [shape: f32[1,32], index: 10, kind: input, shape index: {}]
  %s11 = inlined_call_operand.vmem [shape: f32[8,8], index: 11, kind: input, shape index: {}]
  %s12 = inlined_call_operand.hbm [shape: f32[16,32], index: 12, kind: output, shape index: {}]
  %s13 = sld [smem:[#allocation0]]
  $region58: #{tpu_custom_call.1} parent=0
    _
  %s15 = ssub.s32 1, %s13
  %s16 = scalar_select 0, %s15, %s13
  $region1: #{tpu_custom_call.1} parent=0
    #allocation3 [shape = 'u8[8192]{0}', space=vmem, size = 0x2000, scoped, tag = 'output window, operand 0, single buffered']
    #allocation4 [shape = 's32[1]{0}', space=sflag, size = 0x4, scoped, tag = 'scoped memory for tpu_custom_call.1']
    %17 = vsyncpa [#allocation4], 0
    // Predicated region
    $region2: #{tpu_custom_call.1} parent=1 // pred_check
      _
    $region3: #{tpu_custom_call.1} parent=1 // pred_check_branch
      %19 = sbr.rel (0) target = $region5
    $region4: #{tpu_custom_call.1} parent=1 // pred_region
      _
    $region5: #{tpu_custom_call.1} parent=1 // pred_fallthru
      _
    // Predicated region
    $region6: #{tpu_custom_call.1} parent=1 // pred_check
      _
    $region7: #{tpu_custom_call.1} parent=1 // pred_check_branch
      %21 = sbr.rel (0) target = $region9
    $region8: #{tpu_custom_call.1} parent=1 // pred_region
      _
    $region9: #{tpu_custom_call.1} parent=1 // pred_fallthru
      _
    // Predicated region
    $region10: #{tpu_custom_call.1} parent=1 // pred_check
      _
    $region11: #{tpu_custom_call.1} parent=1 // pred_check_branch
      %23 = sbr.rel (0) target = $region13
    $region12: #{tpu_custom_call.1} parent=1 // pred_region
      _
    $region13: #{tpu_custom_call.1} parent=1 // pred_fallthru
      _
    // Predicated region
    $region14: #{tpu_custom_call.1} parent=1 // pred_check
      _
    $region15: #{tpu_custom_call.1} parent=1 // pred_check_branch
      %25 = sbr.rel (0) target = $region17
    $region16: #{tpu_custom_call.1} parent=1 // pred_region
      _
    $region17: #{tpu_custom_call.1} parent=1 // pred_fallthru
      _
    // Predicated region
    $region18: #{tpu_custom_call.1} parent=1 // pred_check
      _
    $region19: #{tpu_custom_call.1} parent=1 // pred_check_branch
      %27 = sbr.rel (0) target = $region21
    $region20: #{tpu_custom_call.1} parent=1 // pred_region
      _
    $region21: #{tpu_custom_call.1} parent=1 // pred_fallthru
      _
    // Predicated region
    $region22: #{tpu_custom_call.1} parent=1 // pred_check
      _
    $region23: #{tpu_custom_call.1} parent=1 // pred_check_branch
      %29 = sbr.rel (0) target = $region25
    $region24: #{tpu_custom_call.1} parent=1 // pred_region
      _
    $region25: #{tpu_custom_call.1} parent=1 // pred_fallthru
      _
    // Predicated region
    $region26: #{tpu_custom_call.1} parent=1 // pred_check
      _
    $region27: #{tpu_custom_call.1} parent=1 // pred_check_branch
      %31 = sbr.rel (0) target = $region29
    $region28: #{tpu_custom_call.1} parent=1 // pred_region
      _
    $region29: #{tpu_custom_call.1} parent=1 // pred_fallthru
      _
    // Predicated region
    $region30: #{tpu_custom_call.1} parent=1 // pred_check
      _
    $region31: #{tpu_custom_call.1} parent=1 // pred_check_branch
      %33 = sbr.rel (0) target = $region33
    $region32: #{tpu_custom_call.1} parent=1 // pred_region
      _
    $region33: #{tpu_custom_call.1} parent=1 // pred_fallthru
      _
    // Predicated region
    $region34: #{tpu_custom_call.1} parent=1 // pred_check
      _
    $region35: #{tpu_custom_call.1} parent=1 // pred_check_branch
      %35 = sbr.rel (0) target = $region37
    $region36: #{tpu_custom_call.1} parent=1 // pred_region
      _
    $region37: #{tpu_custom_call.1} parent=1 // pred_fallthru
      _
    // Predicated region
    $region38: #{tpu_custom_call.1} parent=1 // pred_check
      _
    $region39: #{tpu_custom_call.1} parent=1 // pred_check_branch
      %37 = sbr.rel (0) target = $region41
    $region40: #{tpu_custom_call.1} parent=1 // pred_region
      _
    $region41: #{tpu_custom_call.1} parent=1 // pred_fallthru
      _
    // Predicated region
    $region42: #{tpu_custom_call.1} parent=1 // pred_check
      _
    $region43: #{tpu_custom_call.1} parent=1 // pred_check_branch
      %39 = sbr.rel (0) target = $region45
    $region44: #{tpu_custom_call.1} parent=1 // pred_region
      _
    $region45: #{tpu_custom_call.1} parent=1 // pred_fallthru
      _
    // Predicated region
    $region46: #{tpu_custom_call.1} parent=1 // pred_check
      _
    $region47: #{tpu_custom_call.1} parent=1 // pred_check_branch
      %41 = sbr.rel (0) target = $region49
    $region48: #{tpu_custom_call.1} parent=1 // pred_region
      _
    $region49: #{tpu_custom_call.1} parent=1 // pred_fallthru
      _
    %v42 = vld [vmem:[%s0] sm:$0xff]
    %v43 = vld [vmem:[%s0 + $0x8] sm:$0xff]
    %v44 = vld [vmem:[%s1] sm:$0x1]
    %v45 = vld [vmem:[%s2] sm:$0x1]
    %vm46 = vcmask 261120
    %v47 = vsel %vm46, %v42, 0.0
    %48 = vadd.xlane.f32.xlu0 %v47
    %v49 = vpop.xlane.xlu0 %48
    %v50 = vsel %vm46, %v43, 0.0
    %51 = vadd.xlane.f32.xlu0 %v50
    %v52 = vpop.xlane.xlu0 %51
    %v53 = vrcp.pop 32.0
    %v54 = vmul.f32 %v49, %v53
    %v55 = vmul.f32 %v52, %v53
    %v56 = vsub.f32 %v42, %v54
    %v57 = vsub.f32 %v43, %v55
    %v58 = vmul.f32 %v56, %v56
    %v59 = vmul.f32 %v57, %v57
    %v60 = vsel %vm46, %v58, 0.0
    %61 = vadd.xlane.f32.xlu0 %v60
    %v62 = vpop.xlane.xlu0 %61
    %v63 = vsel %vm46, %v59, 0.0
    %64 = vadd.xlane.f32.xlu0 %v63
    %v65 = vpop.xlane.xlu0 %64
    %v66 = vmul.f32 %v62, %v53
    %v67 = vmul.f32 %v65, %v53
    %v68 = vadd.f32 %v66, 1e-05
    %v69 = vadd.f32 %v67, 1e-05
    %v70 = vrsqrt.pop %v68
    %v71 = vrsqrt.pop %v69
    %v72 = vmul.f32 %v56, %v70
    %v73 = vmul.f32 %v57, %v71
    %v75 = vlaneseq
    %v76 = vshrl.u32 %v75, 7
    %v77 = vsub.s32 0, %v76
    %v78 = vrot.slane %v44, %v77
    %v80 = vmul.f32 %v72, %v78
    %v81 = vmul.f32 %v73, %v78
    %v83 = vlaneseq
    %v84 = vshrl.u32 %v83, 7
    %v85 = vsub.s32 0, %v84
    %v86 = vrot.slane %v45, %v85
    %v88 = vadd.f32 %v80, %v86
    %v89 = vadd.f32 %v81, %v86
    %v90 = vld [vmem:[%s3] sm:$0xff]
    %v91 = vld [vmem:[%s3 + $0x8] sm:$0xff]
    %v92 = vld [vmem:[%s3 + $0x10] sm:$0xff]
    %v93 = vld [vmem:[%s3 + $0x18] sm:$0xff]
    %v95 = vsel %vm46, %v88, 0
    %v98 = vsel %vm46, %v89, 0
    %100 = vmatprep.subr.mxu0 0.0
    %101 = vmatpush1.msra.mxu0 %v90
    %102 = vmatprep.subr.mxu0 0.0
    %103 = vmatpush1.msra.mxu0 %v91
    %104 = vmatprep.subr.mxu0 0.0
    %105 = vmatpush1.msra.mxu0 %v92
    %106 = vmatprep.subr.mxu0 0.0
    %107 = vmatpush1.msra.mxu0 %v93
    %108 = vmatprep.subr.mxu0 0.0
    %109 = vmatpush1.msra.mxu0 0.0
    %110 = vmatprep.subr.mxu0 0.0
    %111 = vmatpush1.msra.mxu0 0.0
    %112 = vmatprep.subr.mxu0 0.0
    %113 = vmatpush1.msra.mxu0 0.0
    %114 = vmatprep.subr.mxu0 0.0
    %115 = vmatpush1.msra.mxu0 0.0
    %116 = vmatprep.subr.mxu0 0.0
    %117 = vmatpush1.msra.mxu0 0.0
    %118 = vmatprep.subr.mxu0 0.0
    %119 = vmatpush1.msra.mxu0 0.0
    %120 = vmatprep.subr.mxu0 0.0
    %121 = vmatpush1.msra.mxu0 0.0
    %122 = vmatprep.subr.mxu0 0.0
    %123 = vmatpush1.msra.mxu0 0.0
    %124 = vmatprep.subr.mxu0 0.0
    %125 = vmatpush1.msra.mxu0 0.0
    %126 = vmatprep.subr.mxu0 0.0
    %127 = vmatpush1.msra.mxu0 0.0
    %128 = vmatprep.subr.mxu0 0.0
    %129 = vmatpush1.msra.mxu0 0.0
    %130 = vmatprep.subr.mxu0 0.0
    %131 = vmatpush1.msra.mxu0 0.0
    %132 = vmatprep.subr.mxu0 0.0
    %133 = vmatpush1.msra.mxu0 0.0
    %134 = vmatprep.subr.mxu0 0.0
    %135 = vmatpush1.msra.mxu0 0.0
    %136 = vmatprep.subr.mxu0 0.0
    %137 = vmatpush1.msra.mxu0 0.0
    %138 = vmatprep.subr.mxu0 0.0
    %139 = vmatpush1.msra.mxu0 0.0
    %140 = vmatprep.subr.mxu0 0.0
    %141 = vmatpush1.msra.mxu0 0.0
    %142 = vmatprep.subr.mxu0 0.0
    %143 = vmatpush1.msra.mxu0 0.0
    %144 = vmatprep.subr.mxu0 0.0
    %145 = vmatpush1.msra.mxu0 0.0
    %146 = vmatprep.subr.mxu0 0.0
    %147 = vmatpush1.msra.mxu0 0.0
    %148 = vmatprep.subr.mxu0 0.0
    %149 = vmatpush1.msra.mxu0 0.0
    %150 = vmatprep.subr.mxu0 0.0
    %151 = vmatpush1.msra.mxu0 0.0
    %152 = vmatprep.subr.mxu0 0.0
    %153 = vmatpush1.msra.mxu0 0.0
    %154 = vmatprep.subr.mxu0 0.0
    %155 = vmatpush1.msra.mxu0 0.0
    %156 = vmatprep.subr.mxu0 0.0
    %157 = vmatpush1.msra.mxu0 0.0
    %158 = vmatprep.subr.mxu0 0.0
    %159 = vmatpush1.msra.mxu0 0.0
    %160 = vmatprep.subr.mxu0 0.0
    %161 = vmatpush1.msra.mxu0 0.0
    %162 = vmatprep.subr.mxu0 0.0
    %163 = vmatpush1.msra.mxu0 0.0
    %164 = vmatprep.mubr.f32.mxu0 0.0
    %165 = vmatmul.mubr.f32.gmra.mrb[0].mxu0 %v95
    %v166 = vpop.f32.mrb[0].mxu0
    %v167 = vadd.f32 0.0, %v166
    %v168 = vpop.f32.mrb[0].mxu0
    %169 = vmatprep.mubr.f32.mxu0 0.0
    %170 = vmatmul.mubr.f32.gmra.mrb[0].mxu0 %v98
    %v171 = vpop.f32.mrb[0].mxu0
    %v172 = vadd.f32 0.0, %v171
    %v173 = vpop.f32.mrb[0].mxu0
    %174 = vdwg.mxu0
    %v175 = vld [vmem:[%s11] sm:$0xff]
    %177 = vrot.lane.b32.xlu0 %v167, 96
    %v178 = vpop.permute.xlu0 %177
    %vm179 = vcmask 64512
    %v180 = vsel %vm179, %v167, 0
    %v182 = vsel %vm179, %v178, 0
    %184 = vmatprep.subr.mxu0 0.0
    %185 = vmatpush1.xpose.msra.mxu0 %v182
    %186 = vmatprep.subr.mxu0 0.0
    %187 = vmatpush1.xpose.msra.mxu0 0.0
    %188 = vmatprep.subr.mxu0 0.0
    %189 = vmatpush1.xpose.msra.mxu0 0.0
    %190 = vmatprep.subr.mxu0 0.0
    %191 = vmatpush1.xpose.msra.mxu0 0.0
    %192 = vmatprep.subr.mxu0 0.0
    %193 = vmatpush1.xpose.msra.mxu0 0.0
    %194 = vmatprep.subr.mxu0 0.0
    %195 = vmatpush1.xpose.msra.mxu0 0.0
    %196 = vmatprep.subr.mxu0 0.0
    %197 = vmatpush1.xpose.msra.mxu0 0.0
    %198 = vmatprep.subr.mxu0 0.0
    %199 = vmatpush1.xpose.msra.mxu0 0.0
    %200 = vmatprep.subr.mxu0 0.0
    %201 = vmatpush1.xpose.msra.mxu0 0.0
    %202 = vmatprep.subr.mxu0 0.0
    %203 = vmatpush1.xpose.msra.mxu0 0.0
    %204 = vmatprep.subr.mxu0 0.0
    %205 = vmatpush1.xpose.msra.mxu0 0.0
    %206 = vmatprep.subr.mxu0 0.0
    %207 = vmatpush1.xpose.msra.mxu0 0.0
    %208 = vmatprep.subr.mxu0 0.0
    %209 = vmatpush1.xpose.msra.mxu0 0.0
    %210 = vmatprep.subr.mxu0 0.0
    %211 = vmatpush1.xpose.msra.mxu0 0.0
    %212 = vmatprep.subr.mxu0 0.0
    %213 = vmatpush1.xpose.msra.mxu0 0.0
    %214 = vmatprep.subr.mxu0 0.0
    %215 = vmatpush1.xpose.msra.mxu0 0.0
    %216 = vmatprep.subr.mxu0 0.0
    %217 = vmatpush1.xpose.msra.mxu0 0.0
    %218 = vmatprep.subr.mxu0 0.0
    %219 = vmatpush1.xpose.msra.mxu0 0.0
    %220 = vmatprep.subr.mxu0 0.0
    %221 = vmatpush1.xpose.msra.mxu0 0.0
    %222 = vmatprep.subr.mxu0 0.0
    %223 = vmatpush1.xpose.msra.mxu0 0.0
    %224 = vmatprep.subr.mxu0 0.0
    %225 = vmatpush1.xpose.msra.mxu0 0.0
    %226 = vmatprep.subr.mxu0 0.0
    %227 = vmatpush1.xpose.msra.mxu0 0.0
    %228 = vmatprep.subr.mxu0 0.0
    %229 = vmatpush1.xpose.msra.mxu0 0.0
    %230 = vmatprep.subr.mxu0 0.0
    %231 = vmatpush1.xpose.msra.mxu0 0.0
    %232 = vmatprep.subr.mxu0 0.0
    %233 = vmatpush1.xpose.msra.mxu0 0.0
    %234 = vmatprep.subr.mxu0 0.0
    %235 = vmatpush1.xpose.msra.mxu0 0.0
    %236 = vmatprep.subr.mxu0 0.0
    %237 = vmatpush1.xpose.msra.mxu0 0.0
    %238 = vmatprep.subr.mxu0 0.0
    %239 = vmatpush1.xpose.msra.mxu0 0.0
    %240 = vmatprep.subr.mxu0 0.0
    %241 = vmatpush1.xpose.msra.mxu0 0.0
    %242 = vmatprep.subr.mxu0 0.0
    %243 = vmatpush1.xpose.msra.mxu0 0.0
    %244 = vmatprep.subr.mxu0 0.0
    %245 = vmatpush1.xpose.msra.mxu0 0.0
    %246 = vmatprep.subr.mxu0 0.0
    %247 = vmatpush1.xpose.msra.mxu0 0.0
    %248 = vmatprep.mubr.f32.mxu0 0.0
    %249 = vmatmul.mubr.f32.gmra.mrb[0].mxu0 %v180
    %v250 = vpop.f32.mrb[0].mxu0
    %v251 = vadd.f32 %v175, %v250
    %v252 = vpop.f32.mrb[0].mxu0
    %253 = vdwg.mxu0
    %255 = vrot.lane.b32.xlu0 %v172, 96
    %v256 = vpop.permute.xlu0 %255
    %v257 = vsel %vm179, %v172, 0
    %v259 = vsel %vm179, %v256, 0
    %261 = vmatprep.subr.mxu0 0.0
    %262 = vmatpush1.xpose.msra.mxu0 %v259
    %263 = vmatprep.subr.mxu0 0.0
    %264 = vmatpush1.xpose.msra.mxu0 0.0
    %265 = vmatprep.subr.mxu0 0.0
    %266 = vmatpush1.xpose.msra.mxu0 0.0
    %267 = vmatprep.subr.mxu0 0.0
    %268 = vmatpush1.xpose.msra.mxu0 0.0
    %269 = vmatprep.subr.mxu0 0.0
    %270 = vmatpush1.xpose.msra.mxu0 0.0
    %271 = vmatprep.subr.mxu0 0.0
    %272 = vmatpush1.xpose.msra.mxu0 0.0
    %273 = vmatprep.subr.mxu0 0.0
    %274 = vmatpush1.xpose.msra.mxu0 0.0
    %275 = vmatprep.subr.mxu0 0.0
    %276 = vmatpush1.xpose.msra.mxu0 0.0
    %277 = vmatprep.subr.mxu0 0.0
    %278 = vmatpush1.xpose.msra.mxu0 0.0
    %279 = vmatprep.subr.mxu0 0.0
    %280 = vmatpush1.xpose.msra.mxu0 0.0
    %281 = vmatprep.subr.mxu0 0.0
    %282 = vmatpush1.xpose.msra.mxu0 0.0
    %283 = vmatprep.subr.mxu0 0.0
    %284 = vmatpush1.xpose.msra.mxu0 0.0
    %285 = vmatprep.subr.mxu0 0.0
    %286 = vmatpush1.xpose.msra.mxu0 0.0
    %287 = vmatprep.subr.mxu0 0.0
    %288 = vmatpush1.xpose.msra.mxu0 0.0
    %289 = vmatprep.subr.mxu0 0.0
    %290 = vmatpush1.xpose.msra.mxu0 0.0
    %291 = vmatprep.subr.mxu0 0.0
    %292 = vmatpush1.xpose.msra.mxu0 0.0
    %293 = vmatprep.subr.mxu0 0.0
    %294 = vmatpush1.xpose.msra.mxu0 0.0
    %295 = vmatprep.subr.mxu0 0.0
    %296 = vmatpush1.xpose.msra.mxu0 0.0
    %297 = vmatprep.subr.mxu0 0.0
    %298 = vmatpush1.xpose.msra.mxu0 0.0
    %299 = vmatprep.subr.mxu0 0.0
    %300 = vmatpush1.xpose.msra.mxu0 0.0
    %301 = vmatprep.subr.mxu0 0.0
    %302 = vmatpush1.xpose.msra.mxu0 0.0
    %303 = vmatprep.subr.mxu0 0.0
    %304 = vmatpush1.xpose.msra.mxu0 0.0
    %305 = vmatprep.subr.mxu0 0.0
    %306 = vmatpush1.xpose.msra.mxu0 0.0
    %307 = vmatprep.subr.mxu0 0.0
    %308 = vmatpush1.xpose.msra.mxu0 0.0
    %309 = vmatprep.subr.mxu0 0.0
    %310 = vmatpush1.xpose.msra.mxu0 0.0
    %311 = vmatprep.subr.mxu0 0.0
    %312 = vmatpush1.xpose.msra.mxu0 0.0
    %313 = vmatprep.subr.mxu0 0.0
    %314 = vmatpush1.xpose.msra.mxu0 0.0
    %315 = vmatprep.subr.mxu0 0.0
    %316 = vmatpush1.xpose.msra.mxu0 0.0
    %317 = vmatprep.subr.mxu0 0.0
    %318 = vmatpush1.xpose.msra.mxu0 0.0
    %319 = vmatprep.subr.mxu0 0.0
    %320 = vmatpush1.xpose.msra.mxu0 0.0
    %321 = vmatprep.subr.mxu0 0.0
    %322 = vmatpush1.xpose.msra.mxu0 0.0
    %323 = vmatprep.subr.mxu0 0.0
    %324 = vmatpush1.xpose.msra.mxu0 0.0
    %325 = vmatprep.mubr.f32.mxu0 0.0
    %326 = vmatmul.mubr.f32.gmra.mrb[0].mxu0 %v257
    %v327 = vpop.f32.mrb[0].mxu0
    %v328 = vadd.f32 %v175, %v327
    %v329 = vpop.f32.mrb[0].mxu0
    %330 = vdwg.mxu0
    %v331 = vsel %vm179, %v251, -inf
    %332 = vmax.xlane.f32.xlu0 %v331
    %v333 = vpop.xlane.xlu0 %332
    %v334 = vsel %vm179, %v328, -inf
    %335 = vmax.xlane.f32.xlu0 %v334
    %v336 = vpop.xlane.xlu0 %335
    %v337 = vsub.f32 %v251, %v333
    %v338 = vsub.f32 %v328, %v336
    %v339 = vmul.f32 %v337, 1.442695
    %v340 = vpow.pop %v339
    %v341 = vmul.f32 %v338, 1.442695
    %v342 = vpow.pop %v341
    %v343 = vsel %vm179, %v340, 0.0
    %344 = vadd.xlane.f32.xlu0 %v343
    %v345 = vpop.xlane.xlu0 %344
    %v346 = vsel %vm179, %v342, 0.0
    %347 = vadd.xlane.f32.xlu0 %v346
    %v348 = vpop.xlane.xlu0 %347
    %349 = vrot.lane.b32.xlu0 %v167, 64
    %v350 = vpop.permute.xlu0 %349
    %v353 = vsel %vm179, %v340, 0
    %355 = vmatprep.subr.mxu0 0.0
    %356 = vmatpush1.msra.mxu0 %v350
    %357 = vmatprep.subr.mxu0 0.0
    %358 = vmatpush1.msra.mxu0 0.0
    %359 = vmatprep.subr.mxu0 0.0
    %360 = vmatpush1.msra.mxu0 0.0
    %361 = vmatprep.subr.mxu0 0.0
    %362 = vmatpush1.msra.mxu0 0.0
    %363 = vmatprep.subr.mxu0 0.0
    %364 = vmatpush1.msra.mxu0 0.0
    %365 = vmatprep.subr.mxu0 0.0
    %366 = vmatpush1.msra.mxu0 0.0
    %367 = vmatprep.subr.mxu0 0.0
    %368 = vmatpush1.msra.mxu0 0.0
    %369 = vmatprep.subr.mxu0 0.0
    %370 = vmatpush1.msra.mxu0 0.0
    %371 = vmatprep.subr.mxu0 0.0
    %372 = vmatpush1.msra.mxu0 0.0
    %373 = vmatprep.subr.mxu0 0.0
    %374 = vmatpush1.msra.mxu0 0.0
    %375 = vmatprep.subr.mxu0 0.0
    %376 = vmatpush1.msra.mxu0 0.0
    %377 = vmatprep.subr.mxu0 0.0
    %378 = vmatpush1.msra.mxu0 0.0
    %379 = vmatprep.subr.mxu0 0.0
    %380 = vmatpush1.msra.mxu0 0.0
    %381 = vmatprep.subr.mxu0 0.0
    %382 = vmatpush1.msra.mxu0 0.0
    %383 = vmatprep.subr.mxu0 0.0
    %384 = vmatpush1.msra.mxu0 0.0
    %385 = vmatprep.subr.mxu0 0.0
    %386 = vmatpush1.msra.mxu0 0.0
    %387 = vmatprep.subr.mxu0 0.0
    %388 = vmatpush1.msra.mxu0 0.0
    %389 = vmatprep.subr.mxu0 0.0
    %390 = vmatpush1.msra.mxu0 0.0
    %391 = vmatprep.subr.mxu0 0.0
    %392 = vmatpush1.msra.mxu0 0.0
    %393 = vmatprep.subr.mxu0 0.0
    %394 = vmatpush1.msra.mxu0 0.0
    %395 = vmatprep.subr.mxu0 0.0
    %396 = vmatpush1.msra.mxu0 0.0
    %397 = vmatprep.subr.mxu0 0.0
    %398 = vmatpush1.msra.mxu0 0.0
    %399 = vmatprep.subr.mxu0 0.0
    %400 = vmatpush1.msra.mxu0 0.0
    %401 = vmatprep.subr.mxu0 0.0
    %402 = vmatpush1.msra.mxu0 0.0
    %403 = vmatprep.subr.mxu0 0.0
    %404 = vmatpush1.msra.mxu0 0.0
    %405 = vmatprep.subr.mxu0 0.0
    %406 = vmatpush1.msra.mxu0 0.0
    %407 = vmatprep.subr.mxu0 0.0
    %408 = vmatpush1.msra.mxu0 0.0
    %409 = vmatprep.subr.mxu0 0.0
    %410 = vmatpush1.msra.mxu0 0.0
    %411 = vmatprep.subr.mxu0 0.0
    %412 = vmatpush1.msra.mxu0 0.0
    %413 = vmatprep.subr.mxu0 0.0
    %414 = vmatpush1.msra.mxu0 0.0
    %415 = vmatprep.subr.mxu0 0.0
    %416 = vmatpush1.msra.mxu0 0.0
    %417 = vmatprep.subr.mxu0 0.0
    %418 = vmatpush1.msra.mxu0 0.0
    %419 = vmatprep.mubr.f32.mxu0 0.0
    %420 = vmatmul.mubr.f32.gmra.mrb[0].mxu0 %v353
    %v421 = vpop.f32.mrb[0].mxu0
    %v422 = vadd.f32 0.0, %v421
    %v423 = vpop.f32.mrb[0].mxu0
    %424 = vdwg.mxu0
    %425 = vrot.lane.b32.xlu0 %v172, 64
    %v426 = vpop.permute.xlu0 %425
    %v429 = vsel %vm179, %v342, 0
    %431 = vmatprep.subr.mxu0 0.0
    %432 = vmatpush1.msra.mxu0 %v426
    %433 = vmatprep.subr.mxu0 0.0
    %434 = vmatpush1.msra.mxu0 0.0
    %435 = vmatprep.subr.mxu0 0.0
    %436 = vmatpush1.msra.mxu0 0.0
    %437 = vmatprep.subr.mxu0 0.0
    %438 = vmatpush1.msra.mxu0 0.0
    %439 = vmatprep.subr.mxu0 0.0
    %440 = vmatpush1.msra.mxu0 0.0
    %441 = vmatprep.subr.mxu0 0.0
    %442 = vmatpush1.msra.mxu0 0.0
    %443 = vmatprep.subr.mxu0 0.0
    %444 = vmatpush1.msra.mxu0 0.0
    %445 = vmatprep.subr.mxu0 0.0
    %446 = vmatpush1.msra.mxu0 0.0
    %447 = vmatprep.subr.mxu0 0.0
    %448 = vmatpush1.msra.mxu0 0.0
    %449 = vmatprep.subr.mxu0 0.0
    %450 = vmatpush1.msra.mxu0 0.0
    %451 = vmatprep.subr.mxu0 0.0
    %452 = vmatpush1.msra.mxu0 0.0
    %453 = vmatprep.subr.mxu0 0.0
    %454 = vmatpush1.msra.mxu0 0.0
    %455 = vmatprep.subr.mxu0 0.0
    %456 = vmatpush1.msra.mxu0 0.0
    %457 = vmatprep.subr.mxu0 0.0
    %458 = vmatpush1.msra.mxu0 0.0
    %459 = vmatprep.subr.mxu0 0.0
    %460 = vmatpush1.msra.mxu0 0.0
    %461 = vmatprep.subr.mxu0 0.0
    %462 = vmatpush1.msra.mxu0 0.0
    %463 = vmatprep.subr.mxu0 0.0
    %464 = vmatpush1.msra.mxu0 0.0
    %465 = vmatprep.subr.mxu0 0.0
    %466 = vmatpush1.msra.mxu0 0.0
    %467 = vmatprep.subr.mxu0 0.0
    %468 = vmatpush1.msra.mxu0 0.0
    %469 = vmatprep.subr.mxu0 0.0
    %470 = vmatpush1.msra.mxu0 0.0
    %471 = vmatprep.subr.mxu0 0.0
    %472 = vmatpush1.msra.mxu0 0.0
    %473 = vmatprep.subr.mxu0 0.0
    %474 = vmatpush1.msra.mxu0 0.0
    %475 = vmatprep.subr.mxu0 0.0
    %476 = vmatpush1.msra.mxu0 0.0
    %477 = vmatprep.subr.mxu0 0.0
    %478 = vmatpush1.msra.mxu0 0.0
    %479 = vmatprep.subr.mxu0 0.0
    %480 = vmatpush1.msra.mxu0 0.0
    %481 = vmatprep.subr.mxu0 0.0
    %482 = vmatpush1.msra.mxu0 0.0
    %483 = vmatprep.subr.mxu0 0.0
    %484 = vmatpush1.msra.mxu0 0.0
    %485 = vmatprep.subr.mxu0 0.0
    %486 = vmatpush1.msra.mxu0 0.0
    %487 = vmatprep.subr.mxu0 0.0
    %488 = vmatpush1.msra.mxu0 0.0
    %489 = vmatprep.subr.mxu0 0.0
    %490 = vmatpush1.msra.mxu0 0.0
    %491 = vmatprep.subr.mxu0 0.0
    %492 = vmatpush1.msra.mxu0 0.0
    %493 = vmatprep.subr.mxu0 0.0
    %494 = vmatpush1.msra.mxu0 0.0
    %495 = vmatprep.mubr.f32.mxu0 0.0
    %496 = vmatmul.mubr.f32.gmra.mrb[0].mxu0 %v429
    %v497 = vpop.f32.mrb[0].mxu0
    %v498 = vadd.f32 0.0, %v497
    %v499 = vpop.f32.mrb[0].mxu0
    %500 = vdwg.mxu0
    %v501 = vrcp.pop %v345
    %v502 = vrcp.pop %v348
    %v503 = vmul.f32 %v422, %v501
    %v504 = vmul.f32 %v498, %v502
    %505 = vst.msk [vmem:[#allocation2] sm:$0xff] %vm179, %v503
    %506 = vst.msk [vmem:[#allocation2 + $0x8] sm:$0xff] %vm179, %v504
    %507 = vrot.lane.b32.xlu0 %v167, 120
    %v508 = vpop.permute.xlu0 %507
    %509 = vrot.lane.b32.xlu0 %v167, 88
    %v510 = vpop.permute.xlu0 %509
    %v511 = vsel %vm179, %v508, 0
    %v513 = vsel %vm179, %v510, 0
    %515 = vmatprep.subr.mxu0 0.0
    %516 = vmatpush1.xpose.msra.mxu0 %v513
    %517 = vmatprep.subr.mxu0 0.0
    %518 = vmatpush1.xpose.msra.mxu0 0.0
    %519 = vmatprep.subr.mxu0 0.0
    %520 = vmatpush1.xpose.msra.mxu0 0.0
    %521 = vmatprep.subr.mxu0 0.0
    %522 = vmatpush1.xpose.msra.mxu0 0.0
    %523 = vmatprep.subr.mxu0 0.0
    %524 = vmatpush1.xpose.msra.mxu0 0.0
    %525 = vmatprep.subr.mxu0 0.0
    %526 = vmatpush1.xpose.msra.mxu0 0.0
    %527 = vmatprep.subr.mxu0 0.0
    %528 = vmatpush1.xpose.msra.mxu0 0.0
    %529 = vmatprep.subr.mxu0 0.0
    %530 = vmatpush1.xpose.msra.mxu0 0.0
    %531 = vmatprep.subr.mxu0 0.0
    %532 = vmatpush1.xpose.msra.mxu0 0.0
    %533 = vmatprep.subr.mxu0 0.0
    %534 = vmatpush1.xpose.msra.mxu0 0.0
    %535 = vmatprep.subr.mxu0 0.0
    %536 = vmatpush1.xpose.msra.mxu0 0.0
    %537 = vmatprep.subr.mxu0 0.0
    %538 = vmatpush1.xpose.msra.mxu0 0.0
    %539 = vmatprep.subr.mxu0 0.0
    %540 = vmatpush1.xpose.msra.mxu0 0.0
    %541 = vmatprep.subr.mxu0 0.0
    %542 = vmatpush1.xpose.msra.mxu0 0.0
    %543 = vmatprep.subr.mxu0 0.0
    %544 = vmatpush1.xpose.msra.mxu0 0.0
    %545 = vmatprep.subr.mxu0 0.0
    %546 = vmatpush1.xpose.msra.mxu0 0.0
    %547 = vmatprep.subr.mxu0 0.0
    %548 = vmatpush1.xpose.msra.mxu0 0.0
    %549 = vmatprep.subr.mxu0 0.0
    %550 = vmatpush1.xpose.msra.mxu0 0.0
    %551 = vmatprep.subr.mxu0 0.0
    %552 = vmatpush1.xpose.msra.mxu0 0.0
    %553 = vmatprep.subr.mxu0 0.0
    %554 = vmatpush1.xpose.msra.mxu0 0.0
    %555 = vmatprep.subr.mxu0 0.0
    %556 = vmatpush1.xpose.msra.mxu0 0.0
    %557 = vmatprep.subr.mxu0 0.0
    %558 = vmatpush1.xpose.msra.mxu0 0.0
    %559 = vmatprep.subr.mxu0 0.0
    %560 = vmatpush1.xpose.msra.mxu0 0.0
    %561 = vmatprep.subr.mxu0 0.0
    %562 = vmatpush1.xpose.msra.mxu0 0.0
    %563 = vmatprep.subr.mxu0 0.0
    %564 = vmatpush1.xpose.msra.mxu0 0.0
    %565 = vmatprep.subr.mxu0 0.0
    %566 = vmatpush1.xpose.msra.mxu0 0.0
    %567 = vmatprep.subr.mxu0 0.0
    %568 = vmatpush1.xpose.msra.mxu0 0.0
    %569 = vmatprep.subr.mxu0 0.0
    %570 = vmatpush1.xpose.msra.mxu0 0.0
    %571 = vmatprep.subr.mxu0 0.0
    %572 = vmatpush1.xpose.msra.mxu0 0.0
    %573 = vmatprep.subr.mxu0 0.0
    %574 = vmatpush1.xpose.msra.mxu0 0.0
    %575 = vmatprep.subr.mxu0 0.0
    %576 = vmatpush1.xpose.msra.mxu0 0.0
    %577 = vmatprep.subr.mxu0 0.0
    %578 = vmatpush1.xpose.msra.mxu0 0.0
    %579 = vmatprep.mubr.f32.mxu0 0.0
    %580 = vmatmul.mubr.f32.gmra.mrb[0].mxu0 %v511
    %v581 = vpop.f32.mrb[0].mxu0
    %v582 = vadd.f32 %v175, %v581
    %v583 = vpop.f32.mrb[0].mxu0
    %584 = vdwg.mxu0
    %585 = vrot.lane.b32.xlu0 %v172, 120
    %v586 = vpop.permute.xlu0 %585
    %587 = vrot.lane.b32.xlu0 %v172, 88
    %v588 = vpop.permute.xlu0 %587
    %v589 = vsel %vm179, %v586, 0
    %v591 = vsel %vm179, %v588, 0
    %593 = vmatprep.subr.mxu0 0.0
    %594 = vmatpush1.xpose.msra.mxu0 %v591
    %595 = vmatprep.subr.mxu0 0.0
    %596 = vmatpush1.xpose.msra.mxu0 0.0
    %597 = vmatprep.subr.mxu0 0.0
    %598 = vmatpush1.xpose.msra.mxu0 0.0
    %599 = vmatprep.subr.mxu0 0.0
    %600 = vmatpush1.xpose.msra.mxu0 0.0
    %601 = vmatprep.subr.mxu0 0.0
    %602 = vmatpush1.xpose.msra.mxu0 0.0
    %603 = vmatprep.subr.mxu0 0.0
    %604 = vmatpush1.xpose.msra.mxu0 0.0
    %605 = vmatprep.subr.mxu0 0.0
    %606 = vmatpush1.xpose.msra.mxu0 0.0
    %607 = vmatprep.subr.mxu0 0.0
    %608 = vmatpush1.xpose.msra.mxu0 0.0
    %609 = vmatprep.subr.mxu0 0.0
    %610 = vmatpush1.xpose.msra.mxu0 0.0
    %611 = vmatprep.subr.mxu0 0.0
    %612 = vmatpush1.xpose.msra.mxu0 0.0
    %613 = vmatprep.subr.mxu0 0.0
    %614 = vmatpush1.xpose.msra.mxu0 0.0
    %615 = vmatprep.subr.mxu0 0.0
    %616 = vmatpush1.xpose.msra.mxu0 0.0
    %617 = vmatprep.subr.mxu0 0.0
    %618 = vmatpush1.xpose.msra.mxu0 0.0
    %619 = vmatprep.subr.mxu0 0.0
    %620 = vmatpush1.xpose.msra.mxu0 0.0
    %621 = vmatprep.subr.mxu0 0.0
    %622 = vmatpush1.xpose.msra.mxu0 0.0
    %623 = vmatprep.subr.mxu0 0.0
    %624 = vmatpush1.xpose.msra.mxu0 0.0
    %625 = vmatprep.subr.mxu0 0.0
    %626 = vmatpush1.xpose.msra.mxu0 0.0
    %627 = vmatprep.subr.mxu0 0.0
    %628 = vmatpush1.xpose.msra.mxu0 0.0
    %629 = vmatprep.subr.mxu0 0.0
    %630 = vmatpush1.xpose.msra.mxu0 0.0
    %631 = vmatprep.subr.mxu0 0.0
    %632 = vmatpush1.xpose.msra.mxu0 0.0
    %633 = vmatprep.subr.mxu0 0.0
    %634 = vmatpush1.xpose.msra.mxu0 0.0
    %635 = vmatprep.subr.mxu0 0.0
    %636 = vmatpush1.xpose.msra.mxu0 0.0
    %637 = vmatprep.subr.mxu0 0.0
    %638 = vmatpush1.xpose.msra.mxu0 0.0
    %639 = vmatprep.subr.mxu0 0.0
    %640 = vmatpush1.xpose.msra.mxu0 0.0
    %641 = vmatprep.subr.mxu0 0.0
    %642 = vmatpush1.xpose.msra.mxu0 0.0
    %643 = vmatprep.subr.mxu0 0.0
    %644 = vmatpush1.xpose.msra.mxu0 0.0
    %645 = vmatprep.subr.mxu0 0.0
    %646 = vmatpush1.xpose.msra.mxu0 0.0
    %647 = vmatprep.subr.mxu0 0.0
    %648 = vmatpush1.xpose.msra.mxu0 0.0
    %649 = vmatprep.subr.mxu0 0.0
    %650 = vmatpush1.xpose.msra.mxu0 0.0
    %651 = vmatprep.subr.mxu0 0.0
    %652 = vmatpush1.xpose.msra.mxu0 0.0
    %653 = vmatprep.subr.mxu0 0.0
    %654 = vmatpush1.xpose.msra.mxu0 0.0
    %655 = vmatprep.subr.mxu0 0.0
    %656 = vmatpush1.xpose.msra.mxu0 0.0
    %657 = vmatprep.mubr.f32.mxu0 0.0
    %658 = vmatmul.mubr.f32.gmra.mrb[0].mxu0 %v589
    %v659 = vpop.f32.mrb[0].mxu0
    %v660 = vadd.f32 %v175, %v659
    %v661 = vpop.f32.mrb[0].mxu0
    %662 = vdwg.mxu0
    %v663 = vsel %vm179, %v582, -inf
    %664 = vmax.xlane.f32.xlu0 %v663
    %v665 = vpop.xlane.xlu0 %664
    %v666 = vsel %vm179, %v660, -inf
    %667 = vmax.xlane.f32.xlu0 %v666
    %v668 = vpop.xlane.xlu0 %667
    %v669 = vsub.f32 %v582, %v665
    %v670 = vsub.f32 %v660, %v668
    %v671 = vmul.f32 %v669, 1.442695
    %v672 = vpow.pop %v671
    %v673 = vmul.f32 %v670, 1.442695
    %v674 = vpow.pop %v673
    %v675 = vsel %vm179, %v672, 0.0
    %676 = vadd.xlane.f32.xlu0 %v675
    %v677 = vpop.xlane.xlu0 %676
    %v678 = vsel %vm179, %v674, 0.0
    %679 = vadd.xlane.f32.xlu0 %v678
    %v680 = vpop.xlane.xlu0 %679
    %681 = vrot.lane.b32.xlu0 %v167, 56
    %v682 = vpop.permute.xlu0 %681
    %v685 = vsel %vm179, %v672, 0
    %687 = vmatprep.subr.mxu0 0.0
    %688 = vmatpush1.msra.mxu0 %v682
    %689 = vmatprep.subr.mxu0 0.0
    %690 = vmatpush1.msra.mxu0 0.0
    %691 = vmatprep.subr.mxu0 0.0
    %692 = vmatpush1.msra.mxu0 0.0
    %693 = vmatprep.subr.mxu0 0.0
    %694 = vmatpush1.msra.mxu0 0.0
    %695 = vmatprep.subr.mxu0 0.0
    %696 = vmatpush1.msra.mxu0 0.0
    %697 = vmatprep.subr.mxu0 0.0
    %698 = vmatpush1.msra.mxu0 0.0
    %699 = vmatprep.subr.mxu0 0.0
    %700 = vmatpush1.msra.mxu0 0.0
    %701 = vmatprep.subr.mxu0 0.0
    %702 = vmatpush1.msra.mxu0 0.0
    %703 = vmatprep.subr.mxu0 0.0
    %704 = vmatpush1.msra.mxu0 0.0
    %705 = vmatprep.subr.mxu0 0.0
    %706 = vmatpush1.msra.mxu0 0.0
    %707 = vmatprep.subr.mxu0 0.0
    %708 = vmatpush1.msra.mxu0 0.0
    %709 = vmatprep.subr.mxu0 0.0
    %710 = vmatpush1.msra.mxu0 0.0
    %711 = vmatprep.subr.mxu0 0.0
    %712 = vmatpush1.msra.mxu0 0.0
    %713 = vmatprep.subr.mxu0 0.0
    %714 = vmatpush1.msra.mxu0 0.0
    %715 = vmatprep.subr.mxu0 0.0
    %716 = vmatpush1.msra.mxu0 0.0
    %717 = vmatprep.subr.mxu0 0.0
    %718 = vmatpush1.msra.mxu0 0.0
    %719 = vmatprep.subr.mxu0 0.0
    %720 = vmatpush1.msra.mxu0 0.0
    %721 = vmatprep.subr.mxu0 0.0
    %722 = vmatpush1.msra.mxu0 0.0
    %723 = vmatprep.subr.mxu0 0.0
    %724 = vmatpush1.msra.mxu0 0.0
    %725 = vmatprep.subr.mxu0 0.0
    %726 = vmatpush1.msra.mxu0 0.0
    %727 = vmatprep.subr.mxu0 0.0
    %728 = vmatpush1.msra.mxu0 0.0
    %729 = vmatprep.subr.mxu0 0.0
    %730 = vmatpush1.msra.mxu0 0.0
    %731 = vmatprep.subr.mxu0 0.0
    %732 = vmatpush1.msra.mxu0 0.0
    %733 = vmatprep.subr.mxu0 0.0
    %734 = vmatpush1.msra.mxu0 0.0
    %735 = vmatprep.subr.mxu0 0.0
    %736 = vmatpush1.msra.mxu0 0.0
    %737 = vmatprep.subr.mxu0 0.0
    %738 = vmatpush1.msra.mxu0 0.0
    %739 = vmatprep.subr.mxu0 0.0
    %740 = vmatpush1.msra.mxu0 0.0
    %741 = vmatprep.subr.mxu0 0.0
    %742 = vmatpush1.msra.mxu0 0.0
    %743 = vmatprep.subr.mxu0 0.0
    %744 = vmatpush1.msra.mxu0 0.0
    %745 = vmatprep.subr.mxu0 0.0
    %746 = vmatpush1.msra.mxu0 0.0
    %747 = vmatprep.subr.mxu0 0.0
    %748 = vmatpush1.msra.mxu0 0.0
    %749 = vmatprep.subr.mxu0 0.0
    %750 = vmatpush1.msra.mxu0 0.0
    %751 = vmatprep.mubr.f32.mxu0 0.0
    %752 = vmatmul.mubr.f32.gmra.mrb[0].mxu0 %v685
    %v753 = vpop.f32.mrb[0].mxu0
    %v754 = vadd.f32 0.0, %v753
    %v755 = vpop.f32.mrb[0].mxu0
    %756 = vdwg.mxu0
    %757 = vrot.lane.b32.xlu0 %v172, 56
    %v758 = vpop.permute.xlu0 %757
    %v761 = vsel %vm179, %v674, 0
    %763 = vmatprep.subr.mxu0 0.0
    %764 = vmatpush1.msra.mxu0 %v758
    %765 = vmatprep.subr.mxu0 0.0
    %766 = vmatpush1.msra.mxu0 0.0
    %767 = vmatprep.subr.mxu0 0.0
    %768 = vmatpush1.msra.mxu0 0.0
    %769 = vmatprep.subr.mxu0 0.0
    %770 = vmatpush1.msra.mxu0 0.0
    %771 = vmatprep.subr.mxu0 0.0
    %772 = vmatpush1.msra.mxu0 0.0
    %773 = vmatprep.subr.mxu0 0.0
    %774 = vmatpush1.msra.mxu0 0.0
    %775 = vmatprep.subr.mxu0 0.0
    %776 = vmatpush1.msra.mxu0 0.0
    %777 = vmatprep.subr.mxu0 0.0
    %778 = vmatpush1.msra.mxu0 0.0
    %779 = vmatprep.subr.mxu0 0.0
    %780 = vmatpush1.msra.mxu0 0.0
    %781 = vmatprep.subr.mxu0 0.0
    %782 = vmatpush1.msra.mxu0 0.0
    %783 = vmatprep.subr.mxu0 0.0
    %784 = vmatpush1.msra.mxu0 0.0
    %785 = vmatprep.subr.mxu0 0.0
    %786 = vmatpush1.msra.mxu0 0.0
    %787 = vmatprep.subr.mxu0 0.0
    %788 = vmatpush1.msra.mxu0 0.0
    %789 = vmatprep.subr.mxu0 0.0
    %790 = vmatpush1.msra.mxu0 0.0
    %791 = vmatprep.subr.mxu0 0.0
    %792 = vmatpush1.msra.mxu0 0.0
    %793 = vmatprep.subr.mxu0 0.0
    %794 = vmatpush1.msra.mxu0 0.0
    %795 = vmatprep.subr.mxu0 0.0
    %796 = vmatpush1.msra.mxu0 0.0
    %797 = vmatprep.subr.mxu0 0.0
    %798 = vmatpush1.msra.mxu0 0.0
    %799 = vmatprep.subr.mxu0 0.0
    %800 = vmatpush1.msra.mxu0 0.0
    %801 = vmatprep.subr.mxu0 0.0
    %802 = vmatpush1.msra.mxu0 0.0
    %803 = vmatprep.subr.mxu0 0.0
    %804 = vmatpush1.msra.mxu0 0.0
    %805 = vmatprep.subr.mxu0 0.0
    %806 = vmatpush1.msra.mxu0 0.0
    %807 = vmatprep.subr.mxu0 0.0
    %808 = vmatpush1.msra.mxu0 0.0
    %809 = vmatprep.subr.mxu0 0.0
    %810 = vmatpush1.msra.mxu0 0.0
    %811 = vmatprep.subr.mxu0 0.0
    %812 = vmatpush1.msra.mxu0 0.0
    %813 = vmatprep.subr.mxu0 0.0
    %814 = vmatpush1.msra.mxu0 0.0
    %815 = vmatprep.subr.mxu0 0.0
    %816 = vmatpush1.msra.mxu0 0.0
    %817 = vmatprep.subr.mxu0 0.0
    %818 = vmatpush1.msra.mxu0 0.0
    %819 = vmatprep.subr.mxu0 0.0
    %820 = vmatpush1.msra.mxu0 0.0
    %821 = vmatprep.subr.mxu0 0.0
    %822 = vmatpush1.msra.mxu0 0.0
    %823 = vmatprep.subr.mxu0 0.0
    %824 = vmatpush1.msra.mxu0 0.0
    %825 = vmatprep.subr.mxu0 0.0
    %826 = vmatpush1.msra.mxu0 0.0
    %827 = vmatprep.mubr.f32.mxu0 0.0
    %828 = vmatmul.mubr.f32.gmra.mrb[0].mxu0 %v761
    %v829 = vpop.f32.mrb[0].mxu0
    %v830 = vadd.f32 0.0, %v829
    %v831 = vpop.f32.mrb[0].mxu0
    %832 = vdwg.mxu0
    %v833 = vrcp.pop %v677
    %v834 = vrcp.pop %v680
    %v835 = vmul.f32 %v754, %v833
    %v836 = vmul.f32 %v830, %v834
    %839 = vrot.lane.b32.xlu0 %v835, 8
    %v840 = vpop.permute.xlu0 %839
    %841 = vrot.lane.b32.xlu0 %v836, 8
    %v842 = vpop.permute.xlu0 %841
    %vm845 = vcmask 130112
    %846 = vst.msk [vmem:[#allocation2] sm:$0xff] %vm845, %v840
    %847 = vst.msk [vmem:[#allocation2 + $0x8] sm:$0xff] %vm845, %v842
    %848 = vrot.lane.b32.xlu0 %v167, 112
    %v849 = vpop.permute.xlu0 %848
    %850 = vrot.lane.b32.xlu0 %v167, 80
    %v851 = vpop.permute.xlu0 %850
    %v852 = vsel %vm179, %v849, 0
    %v854 = vsel %vm179, %v851, 0
    %856 = vmatprep.subr.mxu0 0.0
    %857 = vmatpush1.xpose.msra.mxu0 %v854
    %858 = vmatprep.subr.mxu0 0.0
    %859 = vmatpush1.xpose.msra.mxu0 0.0
    %860 = vmatprep.subr.mxu0 0.0
    %861 = vmatpush1.xpose.msra.mxu0 0.0
    %862 = vmatprep.subr.mxu0 0.0
    %863 = vmatpush1.xpose.msra.mxu0 0.0
    %864 = vmatprep.subr.mxu0 0.0
    %865 = vmatpush1.xpose.msra.mxu0 0.0
    %866 = vmatprep.subr.mxu0 0.0
    %867 = vmatpush1.xpose.msra.mxu0 0.0
    %868 = vmatprep.subr.mxu0 0.0
    %869 = vmatpush1.xpose.msra.mxu0 0.0
    %870 = vmatprep.subr.mxu0 0.0
    %871 = vmatpush1.xpose.msra.mxu0 0.0
    %872 = vmatprep.subr.mxu0 0.0
    %873 = vmatpush1.xpose.msra.mxu0 0.0
    %874 = vmatprep.subr.mxu0 0.0
    %875 = vmatpush1.xpose.msra.mxu0 0.0
    %876 = vmatprep.subr.mxu0 0.0
    %877 = vmatpush1.xpose.msra.mxu0 0.0
    %878 = vmatprep.subr.mxu0 0.0
    %879 = vmatpush1.xpose.msra.mxu0 0.0
    %880 = vmatprep.subr.mxu0 0.0
    %881 = vmatpush1.xpose.msra.mxu0 0.0
    %882 = vmatprep.subr.mxu0 0.0
    %883 = vmatpush1.xpose.msra.mxu0 0.0
    %884 = vmatprep.subr.mxu0 0.0
    %885 = vmatpush1.xpose.msra.mxu0 0.0
    %886 = vmatprep.subr.mxu0 0.0
    %887 = vmatpush1.xpose.msra.mxu0 0.0
    %888 = vmatprep.subr.mxu0 0.0
    %889 = vmatpush1.xpose.msra.mxu0 0.0
    %890 = vmatprep.subr.mxu0 0.0
    %891 = vmatpush1.xpose.msra.mxu0 0.0
    %892 = vmatprep.subr.mxu0 0.0
    %893 = vmatpush1.xpose.msra.mxu0 0.0
    %894 = vmatprep.subr.mxu0 0.0
    %895 = vmatpush1.xpose.msra.mxu0 0.0
    %896 = vmatprep.subr.mxu0 0.0
    %897 = vmatpush1.xpose.msra.mxu0 0.0
    %898 = vmatprep.subr.mxu0 0.0
    %899 = vmatpush1.xpose.msra.mxu0 0.0
    %900 = vmatprep.subr.mxu0 0.0
    %901 = vmatpush1.xpose.msra.mxu0 0.0
    %902 = vmatprep.subr.mxu0 0.0
    %903 = vmatpush1.xpose.msra.mxu0 0.0
    %904 = vmatprep.subr.mxu0 0.0
    %905 = vmatpush1.xpose.msra.mxu0 0.0
    %906 = vmatprep.subr.mxu0 0.0
    %907 = vmatpush1.xpose.msra.mxu0 0.0
    %908 = vmatprep.subr.mxu0 0.0
    %909 = vmatpush1.xpose.msra.mxu0 0.0
    %910 = vmatprep.subr.mxu0 0.0
    %911 = vmatpush1.xpose.msra.mxu0 0.0
    %912 = vmatprep.subr.mxu0 0.0
    %913 = vmatpush1.xpose.msra.mxu0 0.0
    %914 = vmatprep.subr.mxu0 0.0
    %915 = vmatpush1.xpose.msra.mxu0 0.0
    %916 = vmatprep.subr.mxu0 0.0
    %917 = vmatpush1.xpose.msra.mxu0 0.0
    %918 = vmatprep.subr.mxu0 0.0
    %919 = vmatpush1.xpose.msra.mxu0 0.0
    %920 = vmatprep.mubr.f32.mxu0 0.0
    %921 = vmatmul.mubr.f32.gmra.mrb[0].mxu0 %v852
    %v922 = vpop.f32.mrb[0].mxu0
    %v923 = vadd.f32 %v175, %v922
    %v924 = vpop.f32.mrb[0].mxu0
    %925 = vdwg.mxu0
    %926 = vrot.lane.b32.xlu0 %v172, 112
    %v927 = vpop.permute.xlu0 %926
    %928 = vrot.lane.b32.xlu0 %v172, 80
    %v929 = vpop.permute.xlu0 %928
    %v930 = vsel %vm179, %v927, 0
    %v932 = vsel %vm179, %v929, 0
    %934 = vmatprep.subr.mxu0 0.0
    %935 = vmatpush1.xpose.msra.mxu0 %v932
    %936 = vmatprep.subr.mxu0 0.0
    %937 = vmatpush1.xpose.msra.mxu0 0.0
    %938 = vmatprep.subr.mxu0 0.0
    %939 = vmatpush1.xpose.msra.mxu0 0.0
    %940 = vmatprep.subr.mxu0 0.0
    %941 = vmatpush1.xpose.msra.mxu0 0.0
    %942 = vmatprep.subr.mxu0 0.0
    %943 = vmatpush1.xpose.msra.mxu0 0.0
    %944 = vmatprep.subr.mxu0 0.0
    %945 = vmatpush1.xpose.msra.mxu0 0.0
    %946 = vmatprep.subr.mxu0 0.0
    %947 = vmatpush1.xpose.msra.mxu0 0.0
    %948 = vmatprep.subr.mxu0 0.0
    %949 = vmatpush1.xpose.msra.mxu0 0.0
    %950 = vmatprep.subr.mxu0 0.0
    %951 = vmatpush1.xpose.msra.mxu0 0.0
    %952 = vmatprep.subr.mxu0 0.0
    %953 = vmatpush1.xpose.msra.mxu0 0.0
    %954 = vmatprep.subr.mxu0 0.0
    %955 = vmatpush1.xpose.msra.mxu0 0.0
    %956 = vmatprep.subr.mxu0 0.0
    %957 = vmatpush1.xpose.msra.mxu0 0.0
    %958 = vmatprep.subr.mxu0 0.0
    %959 = vmatpush1.xpose.msra.mxu0 0.0
    %960 = vmatprep.subr.mxu0 0.0
    %961 = vmatpush1.xpose.msra.mxu0 0.0
    %962 = vmatprep.subr.mxu0 0.0
    %963 = vmatpush1.xpose.msra.mxu0 0.0
    %964 = vmatprep.subr.mxu0 0.0
    %965 = vmatpush1.xpose.msra.mxu0 0.0
    %966 = vmatprep.subr.mxu0 0.0
    %967 = vmatpush1.xpose.msra.mxu0 0.0
    %968 = vmatprep.subr.mxu0 0.0
    %969 = vmatpush1.xpose.msra.mxu0 0.0
    %970 = vmatprep.subr.mxu0 0.0
    %971 = vmatpush1.xpose.msra.mxu0 0.0
    %972 = vmatprep.subr.mxu0 0.0
    %973 = vmatpush1.xpose.msra.mxu0 0.0
    %974 = vmatprep.subr.mxu0 0.0
    %975 = vmatpush1.xpose.msra.mxu0 0.0
    %976 = vmatprep.subr.mxu0 0.0
    %977 = vmatpush1.xpose.msra.mxu0 0.0
    %978 = vmatprep.subr.mxu0 0.0
    %979 = vmatpush1.xpose.msra.mxu0 0.0
    %980 = vmatprep.subr.mxu0 0.0
    %981 = vmatpush1.xpose.msra.mxu0 0.0
    %982 = vmatprep.subr.mxu0 0.0
    %983 = vmatpush1.xpose.msra.mxu0 0.0
    %984 = vmatprep.subr.mxu0 0.0
    %985 = vmatpush1.xpose.msra.mxu0 0.0
    %986 = vmatprep.subr.mxu0 0.0
    %987 = vmatpush1.xpose.msra.mxu0 0.0
    %988 = vmatprep.subr.mxu0 0.0
    %989 = vmatpush1.xpose.msra.mxu0 0.0
    %990 = vmatprep.subr.mxu0 0.0
    %991 = vmatpush1.xpose.msra.mxu0 0.0
    %992 = vmatprep.subr.mxu0 0.0
    %993 = vmatpush1.xpose.msra.mxu0 0.0
    %994 = vmatprep.subr.mxu0 0.0
    %995 = vmatpush1.xpose.msra.mxu0 0.0
    %996 = vmatprep.subr.mxu0 0.0
    %997 = vmatpush1.xpose.msra.mxu0 0.0
    %998 = vmatprep.mubr.f32.mxu0 0.0
    %999 = vmatmul.mubr.f32.gmra.mrb[0].mxu0 %v930
    %v1000 = vpop.f32.mrb[0].mxu0
    %v1001 = vadd.f32 %v175, %v1000
    %v1002 = vpop.f32.mrb[0].mxu0
    %1003 = vdwg.mxu0
    %v1004 = vsel %vm179, %v923, -inf
    %1005 = vmax.xlane.f32.xlu0 %v1004
    %v1006 = vpop.xlane.xlu0 %1005
    %v1007 = vsel %vm179, %v1001, -inf
    %1008 = vmax.xlane.f32.xlu0 %v1007
    %v1009 = vpop.xlane.xlu0 %1008
    %v1010 = vsub.f32 %v923, %v1006
    %v1011 = vsub.f32 %v1001, %v1009
    %v1012 = vmul.f32 %v1010, 1.442695
    %v1013 = vpow.pop %v1012
    %v1014 = vmul.f32 %v1011, 1.442695
    %v1015 = vpow.pop %v1014
    %v1016 = vsel %vm179, %v1013, 0.0
    %1017 = vadd.xlane.f32.xlu0 %v1016
    %v1018 = vpop.xlane.xlu0 %1017
    %v1019 = vsel %vm179, %v1015, 0.0
    %1020 = vadd.xlane.f32.xlu0 %v1019
    %v1021 = vpop.xlane.xlu0 %1020
    %1022 = vrot.lane.b32.xlu0 %v167, 48
    %v1023 = vpop.permute.xlu0 %1022
    %v1026 = vsel %vm179, %v1013, 0
    %1028 = vmatprep.subr.mxu0 0.0
    %1029 = vmatpush1.msra.mxu0 %v1023
    %1030 = vmatprep.subr.mxu0 0.0
    %1031 = vmatpush1.msra.mxu0 0.0
    %1032 = vmatprep.subr.mxu0 0.0
    %1033 = vmatpush1.msra.mxu0 0.0
    %1034 = vmatprep.subr.mxu0 0.0
    %1035 = vmatpush1.msra.mxu0 0.0
    %1036 = vmatprep.subr.mxu0 0.0
    %1037 = vmatpush1.msra.mxu0 0.0
    %1038 = vmatprep.subr.mxu0 0.0
    %1039 = vmatpush1.msra.mxu0 0.0
    %1040 = vmatprep.subr.mxu0 0.0
    %1041 = vmatpush1.msra.mxu0 0.0
    %1042 = vmatprep.subr.mxu0 0.0
    %1043 = vmatpush1.msra.mxu0 0.0
    %1044 = vmatprep.subr.mxu0 0.0
    %1045 = vmatpush1.msra.mxu0 0.0
    %1046 = vmatprep.subr.mxu0 0.0
    %1047 = vmatpush1.msra.mxu0 0.0
    %1048 = vmatprep.subr.mxu0 0.0
    %1049 = vmatpush1.msra.mxu0 0.0
    %1050 = vmatprep.subr.mxu0 0.0
    %1051 = vmatpush1.msra.mxu0 0.0
    %1052 = vmatprep.subr.mxu0 0.0
    %1053 = vmatpush1.msra.mxu0 0.0
    %1054 = vmatprep.subr.mxu0 0.0
    %1055 = vmatpush1.msra.mxu0 0.0
    %1056 = vmatprep.subr.mxu0 0.0
    %1057 = vmatpush1.msra.mxu0 0.0
    %1058 = vmatprep.subr.mxu0 0.0
    %1059 = vmatpush1.msra.mxu0 0.0
    %1060 = vmatprep.subr.mxu0 0.0
    %1061 = vmatpush1.msra.mxu0 0.0
    %1062 = vmatprep.subr.mxu0 0.0
    %1063 = vmatpush1.msra.mxu0 0.0
    %1064 = vmatprep.subr.mxu0 0.0
    %1065 = vmatpush1.msra.mxu0 0.0
    %1066 = vmatprep.subr.mxu0 0.0
    %1067 = vmatpush1.msra.mxu0 0.0
    %1068 = vmatprep.subr.mxu0 0.0
    %1069 = vmatpush1.msra.mxu0 0.0
    %1070 = vmatprep.subr.mxu0 0.0
    %1071 = vmatpush1.msra.mxu0 0.0
    %1072 = vmatprep.subr.mxu0 0.0
    %1073 = vmatpush1.msra.mxu0 0.0
    %1074 = vmatprep.subr.mxu0 0.0
    %1075 = vmatpush1.msra.mxu0 0.0
    %1076 = vmatprep.subr.mxu0 0.0
    %1077 = vmatpush1.msra.mxu0 0.0
    %1078 = vmatprep.subr.mxu0 0.0
    %1079 = vmatpush1.msra.mxu0 0.0
    %1080 = vmatprep.subr.mxu0 0.0
    %1081 = vmatpush1.msra.mxu0 0.0
    %1082 = vmatprep.subr.mxu0 0.0
    %1083 = vmatpush1.msra.mxu0 0.0
    %1084 = vmatprep.subr.mxu0 0.0
    %1085 = vmatpush1.msra.mxu0 0.0
    %1086 = vmatprep.subr.mxu0 0.0
    %1087 = vmatpush1.msra.mxu0 0.0
    %1088 = vmatprep.subr.mxu0 0.0
    %1089 = vmatpush1.msra.mxu0 0.0
    %1090 = vmatprep.subr.mxu0 0.0
    %1091 = vmatpush1.msra.mxu0 0.0
    %1092 = vmatprep.mubr.f32.mxu0 0.0
    %1093 = vmatmul.mubr.f32.gmra.mrb[0].mxu0 %v1026
    %v1094 = vpop.f32.mrb[0].mxu0
    %v1095 = vadd.f32 0.0, %v1094
    %v1096 = vpop.f32.mrb[0].mxu0
    %1097 = vdwg.mxu0
    %1098 = vrot.lane.b32.xlu0 %v172, 48
    %v1099 = vpop.permute.xlu0 %1098
    %v1102 = vsel %vm179, %v1015, 0
    %1104 = vmatprep.subr.mxu0 0.0
    %1105 = vmatpush1.msra.mxu0 %v1099
    %1106 = vmatprep.subr.mxu0 0.0
    %1107 = vmatpush1.msra.mxu0 0.0
    %1108 = vmatprep.subr.mxu0 0.0
    %1109 = vmatpush1.msra.mxu0 0.0
    %1110 = vmatprep.subr.mxu0 0.0
    %1111 = vmatpush1.msra.mxu0 0.0
    %1112 = vmatprep.subr.mxu0 0.0
    %1113 = vmatpush1.msra.mxu0 0.0
    %1114 = vmatprep.subr.mxu0 0.0
    %1115 = vmatpush1.msra.mxu0 0.0
    %1116 = vmatprep.subr.mxu0 0.0
    %1117 = vmatpush1.msra.mxu0 0.0
    %1118 = vmatprep.subr.mxu0 0.0
    %1119 = vmatpush1.msra.mxu0 0.0
    %1120 = vmatprep.subr.mxu0 0.0
    %1121 = vmatpush1.msra.mxu0 0.0
    %1122 = vmatprep.subr.mxu0 0.0
    %1123 = vmatpush1.msra.mxu0 0.0
    %1124 = vmatprep.subr.mxu0 0.0
    %1125 = vmatpush1.msra.mxu0 0.0
    %1126 = vmatprep.subr.mxu0 0.0
    %1127 = vmatpush1.msra.mxu0 0.0
    %1128 = vmatprep.subr.mxu0 0.0
    %1129 = vmatpush1.msra.mxu0 0.0
    %1130 = vmatprep.subr.mxu0 0.0
    %1131 = vmatpush1.msra.mxu0 0.0
    %1132 = vmatprep.subr.mxu0 0.0
    %1133 = vmatpush1.msra.mxu0 0.0
    %1134 = vmatprep.subr.mxu0 0.0
    %1135 = vmatpush1.msra.mxu0 0.0
    %1136 = vmatprep.subr.mxu0 0.0
    %1137 = vmatpush1.msra.mxu0 0.0
    %1138 = vmatprep.subr.mxu0 0.0
    %1139 = vmatpush1.msra.mxu0 0.0
    %1140 = vmatprep.subr.mxu0 0.0
    %1141 = vmatpush1.msra.mxu0 0.0
    %1142 = vmatprep.subr.mxu0 0.0
    %1143 = vmatpush1.msra.mxu0 0.0
    %1144 = vmatprep.subr.mxu0 0.0
    %1145 = vmatpush1.msra.mxu0 0.0
    %1146 = vmatprep.subr.mxu0 0.0
    %1147 = vmatpush1.msra.mxu0 0.0
    %1148 = vmatprep.subr.mxu0 0.0
    %1149 = vmatpush1.msra.mxu0 0.0
    %1150 = vmatprep.subr.mxu0 0.0
    %1151 = vmatpush1.msra.mxu0 0.0
    %1152 = vmatprep.subr.mxu0 0.0
    %1153 = vmatpush1.msra.mxu0 0.0
    %1154 = vmatprep.subr.mxu0 0.0
    %1155 = vmatpush1.msra.mxu0 0.0
    %1156 = vmatprep.subr.mxu0 0.0
    %1157 = vmatpush1.msra.mxu0 0.0
    %1158 = vmatprep.subr.mxu0 0.0
    %1159 = vmatpush1.msra.mxu0 0.0
    %1160 = vmatprep.subr.mxu0 0.0
    %1161 = vmatpush1.msra.mxu0 0.0
    %1162 = vmatprep.subr.mxu0 0.0
    %1163 = vmatpush1.msra.mxu0 0.0
    %1164 = vmatprep.subr.mxu0 0.0
    %1165 = vmatpush1.msra.mxu0 0.0
    %1166 = vmatprep.subr.mxu0 0.0
    %1167 = vmatpush1.msra.mxu0 0.0
    %1168 = vmatprep.mubr.f32.mxu0 0.0
    %1169 = vmatmul.mubr.f32.gmra.mrb[0].mxu0 %v1102
    %v1170 = vpop.f32.mrb[0].mxu0
    %v1171 = vadd.f32 0.0, %v1170
    %v1172 = vpop.f32.mrb[0].mxu0
    %1173 = vdwg.mxu0
    %v1174 = vrcp.pop %v1018
    %v1175 = vrcp.pop %v1021
    %v1176 = vmul.f32 %v1095, %v1174
    %v1177 = vmul.f32 %v1171, %v1175
    %1180 = vrot.lane.b32.xlu0 %v1176, 16
    %v1181 = vpop.permute.xlu0 %1180
    %1182 = vrot.lane.b32.xlu0 %v1177, 16
    %v1183 = vpop.permute.xlu0 %1182
    %vm1186 = vcmask 195712
    %1187 = vst.msk [vmem:[#allocation2] sm:$0xff] %vm1186, %v1181
    %1188 = vst.msk [vmem:[#allocation2 + $0x8] sm:$0xff] %vm1186, %v1183
    %1189 = vrot.lane.b32.xlu0 %v167, 104
    %v1190 = vpop.permute.xlu0 %1189
    %1191 = vrot.lane.b32.xlu0 %v167, 72
    %v1192 = vpop.permute.xlu0 %1191
    %v1193 = vsel %vm179, %v1190, 0
    %v1195 = vsel %vm179, %v1192, 0
    %1197 = vmatprep.subr.mxu0 0.0
    %1198 = vmatpush1.xpose.msra.mxu0 %v1195
    %1199 = vmatprep.subr.mxu0 0.0
    %1200 = vmatpush1.xpose.msra.mxu0 0.0
    %1201 = vmatprep.subr.mxu0 0.0
    %1202 = vmatpush1.xpose.msra.mxu0 0.0
    %1203 = vmatprep.subr.mxu0 0.0
    %1204 = vmatpush1.xpose.msra.mxu0 0.0
    %1205 = vmatprep.subr.mxu0 0.0
    %1206 = vmatpush1.xpose.msra.mxu0 0.0
    %1207 = vmatprep.subr.mxu0 0.0
    %1208 = vmatpush1.xpose.msra.mxu0 0.0
    %1209 = vmatprep.subr.mxu0 0.0
    %1210 = vmatpush1.xpose.msra.mxu0 0.0
    %1211 = vmatprep.subr.mxu0 0.0
    %1212 = vmatpush1.xpose.msra.mxu0 0.0
    %1213 = vmatprep.subr.mxu0 0.0
    %1214 = vmatpush1.xpose.msra.mxu0 0.0
    %1215 = vmatprep.subr.mxu0 0.0
    %1216 = vmatpush1.xpose.msra.mxu0 0.0
    %1217 = vmatprep.subr.mxu0 0.0
    %1218 = vmatpush1.xpose.msra.mxu0 0.0
    %1219 = vmatprep.subr.mxu0 0.0
    %1220 = vmatpush1.xpose.msra.mxu0 0.0
    %1221 = vmatprep.subr.mxu0 0.0
    %1222 = vmatpush1.xpose.msra.mxu0 0.0
    %1223 = vmatprep.subr.mxu0 0.0
    %1224 = vmatpush1.xpose.msra.mxu0 0.0
    %1225 = vmatprep.subr.mxu0 0.0
    %1226 = vmatpush1.xpose.msra.mxu0 0.0
    %1227 = vmatprep.subr.mxu0 0.0
    %1228 = vmatpush1.xpose.msra.mxu0 0.0
    %1229 = vmatprep.subr.mxu0 0.0
    %1230 = vmatpush1.xpose.msra.mxu0 0.0
    %1231 = vmatprep.subr.mxu0 0.0
    %1232 = vmatpush1.xpose.msra.mxu0 0.0
    %1233 = vmatprep.subr.mxu0 0.0
    %1234 = vmatpush1.xpose.msra.mxu0 0.0
    %1235 = vmatprep.subr.mxu0 0.0
    %1236 = vmatpush1.xpose.msra.mxu0 0.0
    %1237 = vmatprep.subr.mxu0 0.0
    %1238 = vmatpush1.xpose.msra.mxu0 0.0
    %1239 = vmatprep.subr.mxu0 0.0
    %1240 = vmatpush1.xpose.msra.mxu0 0.0
    %1241 = vmatprep.subr.mxu0 0.0
    %1242 = vmatpush1.xpose.msra.mxu0 0.0
    %1243 = vmatprep.subr.mxu0 0.0
    %1244 = vmatpush1.xpose.msra.mxu0 0.0
    %1245 = vmatprep.subr.mxu0 0.0
    %1246 = vmatpush1.xpose.msra.mxu0 0.0
    %1247 = vmatprep.subr.mxu0 0.0
    %1248 = vmatpush1.xpose.msra.mxu0 0.0
    %1249 = vmatprep.subr.mxu0 0.0
    %1250 = vmatpush1.xpose.msra.mxu0 0.0
    %1251 = vmatprep.subr.mxu0 0.0
    %1252 = vmatpush1.xpose.msra.mxu0 0.0
    %1253 = vmatprep.subr.mxu0 0.0
    %1254 = vmatpush1.xpose.msra.mxu0 0.0
    %1255 = vmatprep.subr.mxu0 0.0
    %1256 = vmatpush1.xpose.msra.mxu0 0.0
    %1257 = vmatprep.subr.mxu0 0.0
    %1258 = vmatpush1.xpose.msra.mxu0 0.0
    %1259 = vmatprep.subr.mxu0 0.0
    %1260 = vmatpush1.xpose.msra.mxu0 0.0
    %1261 = vmatprep.mubr.f32.mxu0 0.0
    %1262 = vmatmul.mubr.f32.gmra.mrb[0].mxu0 %v1193
    %v1263 = vpop.f32.mrb[0].mxu0
    %v1264 = vadd.f32 %v175, %v1263
    %v1265 = vpop.f32.mrb[0].mxu0
    %1266 = vdwg.mxu0
    %1267 = vrot.lane.b32.xlu0 %v172, 104
    %v1268 = vpop.permute.xlu0 %1267
    %1269 = vrot.lane.b32.xlu0 %v172, 72
    %v1270 = vpop.permute.xlu0 %1269
    %v1271 = vsel %vm179, %v1268, 0
    %v1273 = vsel %vm179, %v1270, 0
    %1275 = vmatprep.subr.mxu0 0.0
    %1276 = vmatpush1.xpose.msra.mxu0 %v1273
    %1277 = vmatprep.subr.mxu0 0.0
    %1278 = vmatpush1.xpose.msra.mxu0 0.0
    %1279 = vmatprep.subr.mxu0 0.0
    %1280 = vmatpush1.xpose.msra.mxu0 0.0
    %1281 = vmatprep.subr.mxu0 0.0
    %1282 = vmatpush1.xpose.msra.mxu0 0.0
    %1283 = vmatprep.subr.mxu0 0.0
    %1284 = vmatpush1.xpose.msra.mxu0 0.0
    %1285 = vmatprep.subr.mxu0 0.0
    %1286 = vmatpush1.xpose.msra.mxu0 0.0
    %1287 = vmatprep.subr.mxu0 0.0
    %1288 = vmatpush1.xpose.msra.mxu0 0.0
    %1289 = vmatprep.subr.mxu0 0.0
    %1290 = vmatpush1.xpose.msra.mxu0 0.0
    %1291 = vmatprep.subr.mxu0 0.0
    %1292 = vmatpush1.xpose.msra.mxu0 0.0
    %1293 = vmatprep.subr.mxu0 0.0
    %1294 = vmatpush1.xpose.msra.mxu0 0.0
    %1295 = vmatprep.subr.mxu0 0.0
    %1296 = vmatpush1.xpose.msra.mxu0 0.0
    %1297 = vmatprep.subr.mxu0 0.0
    %1298 = vmatpush1.xpose.msra.mxu0 0.0
    %1299 = vmatprep.subr.mxu0 0.0
    %1300 = vmatpush1.xpose.msra.mxu0 0.0
    %1301 = vmatprep.subr.mxu0 0.0
    %1302 = vmatpush1.xpose.msra.mxu0 0.0
    %1303 = vmatprep.subr.mxu0 0.0
    %1304 = vmatpush1.xpose.msra.mxu0 0.0
    %1305 = vmatprep.subr.mxu0 0.0
    %1306 = vmatpush1.xpose.msra.mxu0 0.0
    %1307 = vmatprep.subr.mxu0 0.0
    %1308 = vmatpush1.xpose.msra.mxu0 0.0
    %1309 = vmatprep.subr.mxu0 0.0
    %1310 = vmatpush1.xpose.msra.mxu0 0.0
    %1311 = vmatprep.subr.mxu0 0.0
    %1312 = vmatpush1.xpose.msra.mxu0 0.0
    %1313 = vmatprep.subr.mxu0 0.0
    %1314 = vmatpush1.xpose.msra.mxu0 0.0
    %1315 = vmatprep.subr.mxu0 0.0
    %1316 = vmatpush1.xpose.msra.mxu0 0.0
    %1317 = vmatprep.subr.mxu0 0.0
    %1318 = vmatpush1.xpose.msra.mxu0 0.0
    %1319 = vmatprep.subr.mxu0 0.0
    %1320 = vmatpush1.xpose.msra.mxu0 0.0
    %1321 = vmatprep.subr.mxu0 0.0
    %1322 = vmatpush1.xpose.msra.mxu0 0.0
    %1323 = vmatprep.subr.mxu0 0.0
    %1324 = vmatpush1.xpose.msra.mxu0 0.0
    %1325 = vmatprep.subr.mxu0 0.0
    %1326 = vmatpush1.xpose.msra.mxu0 0.0
    %1327 = vmatprep.subr.mxu0 0.0
    %1328 = vmatpush1.xpose.msra.mxu0 0.0
    %1329 = vmatprep.subr.mxu0 0.0
    %1330 = vmatpush1.xpose.msra.mxu0 0.0
    %1331 = vmatprep.subr.mxu0 0.0
    %1332 = vmatpush1.xpose.msra.mxu0 0.0
    %1333 = vmatprep.subr.mxu0 0.0
    %1334 = vmatpush1.xpose.msra.mxu0 0.0
    %1335 = vmatprep.subr.mxu0 0.0
    %1336 = vmatpush1.xpose.msra.mxu0 0.0
    %1337 = vmatprep.subr.mxu0 0.0
    %1338 = vmatpush1.xpose.msra.mxu0 0.0
    %1339 = vmatprep.mubr.f32.mxu0 0.0
    %1340 = vmatmul.mubr.f32.gmra.mrb[0].mxu0 %v1271
    %v1341 = vpop.f32.mrb[0].mxu0
    %v1342 = vadd.f32 %v175, %v1341
    %v1343 = vpop.f32.mrb[0].mxu0
    %1344 = vdwg.mxu0
    %v1345 = vsel %vm179, %v1264, -inf
    %1346 = vmax.xlane.f32.xlu0 %v1345
    %v1347 = vpop.xlane.xlu0 %1346
    %v1348 = vsel %vm179, %v1342, -inf
    %1349 = vmax.xlane.f32.xlu0 %v1348
    %v1350 = vpop.xlane.xlu0 %1349
    %v1351 = vsub.f32 %v1264, %v1347
    %v1352 = vsub.f32 %v1342, %v1350
    %v1353 = vmul.f32 %v1351, 1.442695
    %v1354 = vpow.pop %v1353
    %v1355 = vmul.f32 %v1352, 1.442695
    %v1356 = vpow.pop %v1355
    %v1357 = vsel %vm179, %v1354, 0.0
    %1358 = vadd.xlane.f32.xlu0 %v1357
    %v1359 = vpop.xlane.xlu0 %1358
    %v1360 = vsel %vm179, %v1356, 0.0
    %1361 = vadd.xlane.f32.xlu0 %v1360
    %v1362 = vpop.xlane.xlu0 %1361
    %1363 = vrot.lane.b32.xlu0 %v167, 40
    %v1364 = vpop.permute.xlu0 %1363
    %v1367 = vsel %vm179, %v1354, 0
    %1369 = vmatprep.subr.mxu0 0.0
    %1370 = vmatpush1.msra.mxu0 %v1364
    %1371 = vmatprep.subr.mxu0 0.0
    %1372 = vmatpush1.msra.mxu0 0.0
    %1373 = vmatprep.subr.mxu0 0.0
    %1374 = vmatpush1.msra.mxu0 0.0
    %1375 = vmatprep.subr.mxu0 0.0
    %1376 = vmatpush1.msra.mxu0 0.0
    %1377 = vmatprep.subr.mxu0 0.0
    %1378 = vmatpush1.msra.mxu0 0.0
    %1379 = vmatprep.subr.mxu0 0.0
    %1380 = vmatpush1.msra.mxu0 0.0
    %1381 = vmatprep.subr.mxu0 0.0
    %1382 = vmatpush1.msra.mxu0 0.0
    %1383 = vmatprep.subr.mxu0 0.0
    %1384 = vmatpush1.msra.mxu0 0.0
    %1385 = vmatprep.subr.mxu0 0.0
    %1386 = vmatpush1.msra.mxu0 0.0
    %1387 = vmatprep.subr.mxu0 0.0
    %1388 = vmatpush1.msra.mxu0 0.0
    %1389 = vmatprep.subr.mxu0 0.0
    %1390 = vmatpush1.msra.mxu0 0.0
    %1391 = vmatprep.subr.mxu0 0.0
    %1392 = vmatpush1.msra.mxu0 0.0
    %1393 = vmatprep.subr.mxu0 0.0
    %1394 = vmatpush1.msra.mxu0 0.0
    %1395 = vmatprep.subr.mxu0 0.0
    %1396 = vmatpush1.msra.mxu0 0.0
    %1397 = vmatprep.subr.mxu0 0.0
    %1398 = vmatpush1.msra.mxu0 0.0
    %1399 = vmatprep.subr.mxu0 0.0
    %1400 = vmatpush1.msra.mxu0 0.0
    %1401 = vmatprep.subr.mxu0 0.0
    %1402 = vmatpush1.msra.mxu0 0.0
    %1403 = vmatprep.subr.mxu0 0.0
    %1404 = vmatpush1.msra.mxu0 0.0
    %1405 = vmatprep.subr.mxu0 0.0
    %1406 = vmatpush1.msra.mxu0 0.0
    %1407 = vmatprep.subr.mxu0 0.0
    %1408 = vmatpush1.msra.mxu0 0.0
    %1409 = vmatprep.subr.mxu0 0.0
    %1410 = vmatpush1.msra.mxu0 0.0
    %1411 = vmatprep.subr.mxu0 0.0
    %1412 = vmatpush1.msra.mxu0 0.0
    %1413 = vmatprep.subr.mxu0 0.0
    %1414 = vmatpush1.msra.mxu0 0.0
    %1415 = vmatprep.subr.mxu0 0.0
    %1416 = vmatpush1.msra.mxu0 0.0
    %1417 = vmatprep.subr.mxu0 0.0
    %1418 = vmatpush1.msra.mxu0 0.0
    %1419 = vmatprep.subr.mxu0 0.0
    %1420 = vmatpush1.msra.mxu0 0.0
    %1421 = vmatprep.subr.mxu0 0.0
    %1422 = vmatpush1.msra.mxu0 0.0
    %1423 = vmatprep.subr.mxu0 0.0
    %1424 = vmatpush1.msra.mxu0 0.0
    %1425 = vmatprep.subr.mxu0 0.0
    %1426 = vmatpush1.msra.mxu0 0.0
    %1427 = vmatprep.subr.mxu0 0.0
    %1428 = vmatpush1.msra.mxu0 0.0
    %1429 = vmatprep.subr.mxu0 0.0
    %1430 = vmatpush1.msra.mxu0 0.0
    %1431 = vmatprep.subr.mxu0 0.0
    %1432 = vmatpush1.msra.mxu0 0.0
    %1433 = vmatprep.mubr.f32.mxu0 0.0
    %1434 = vmatmul.mubr.f32.gmra.mrb[0].mxu0 %v1367
    %v1435 = vpop.f32.mrb[0].mxu0
    %v1436 = vadd.f32 0.0, %v1435
    %v1437 = vpop.f32.mrb[0].mxu0
    %1438 = vdwg.mxu0
    %1439 = vrot.lane.b32.xlu0 %v172, 40
    %v1440 = vpop.permute.xlu0 %1439
    %v1443 = vsel %vm179, %v1356, 0
    %1445 = vmatprep.subr.mxu0 0.0
    %1446 = vmatpush1.msra.mxu0 %v1440
    %1447 = vmatprep.subr.mxu0 0.0
    %1448 = vmatpush1.msra.mxu0 0.0
    %1449 = vmatprep.subr.mxu0 0.0
    %1450 = vmatpush1.msra.mxu0 0.0
    %1451 = vmatprep.subr.mxu0 0.0
    %1452 = vmatpush1.msra.mxu0 0.0
    %1453 = vmatprep.subr.mxu0 0.0
    %1454 = vmatpush1.msra.mxu0 0.0
    %1455 = vmatprep.subr.mxu0 0.0
    %1456 = vmatpush1.msra.mxu0 0.0
    %1457 = vmatprep.subr.mxu0 0.0
    %1458 = vmatpush1.msra.mxu0 0.0
    %1459 = vmatprep.subr.mxu0 0.0
    %1460 = vmatpush1.msra.mxu0 0.0
    %1461 = vmatprep.subr.mxu0 0.0
    %1462 = vmatpush1.msra.mxu0 0.0
    %1463 = vmatprep.subr.mxu0 0.0
    %1464 = vmatpush1.msra.mxu0 0.0
    %1465 = vmatprep.subr.mxu0 0.0
    %1466 = vmatpush1.msra.mxu0 0.0
    %1467 = vmatprep.subr.mxu0 0.0
    %1468 = vmatpush1.msra.mxu0 0.0
    %1469 = vmatprep.subr.mxu0 0.0
    %1470 = vmatpush1.msra.mxu0 0.0
    %1471 = vmatprep.subr.mxu0 0.0
    %1472 = vmatpush1.msra.mxu0 0.0
    %1473 = vmatprep.subr.mxu0 0.0
    %1474 = vmatpush1.msra.mxu0 0.0
    %1475 = vmatprep.subr.mxu0 0.0
    %1476 = vmatpush1.msra.mxu0 0.0
    %1477 = vmatprep.subr.mxu0 0.0
    %1478 = vmatpush1.msra.mxu0 0.0
    %1479 = vmatprep.subr.mxu0 0.0
    %1480 = vmatpush1.msra.mxu0 0.0
    %1481 = vmatprep.subr.mxu0 0.0
    %1482 = vmatpush1.msra.mxu0 0.0
    %1483 = vmatprep.subr.mxu0 0.0
    %1484 = vmatpush1.msra.mxu0 0.0
    %1485 = vmatprep.subr.mxu0 0.0
    %1486 = vmatpush1.msra.mxu0 0.0
    %1487 = vmatprep.subr.mxu0 0.0
    %1488 = vmatpush1.msra.mxu0 0.0
    %1489 = vmatprep.subr.mxu0 0.0
    %1490 = vmatpush1.msra.mxu0 0.0
    %1491 = vmatprep.subr.mxu0 0.0
    %1492 = vmatpush1.msra.mxu0 0.0
    %1493 = vmatprep.subr.mxu0 0.0
    %1494 = vmatpush1.msra.mxu0 0.0
    %1495 = vmatprep.subr.mxu0 0.0
    %1496 = vmatpush1.msra.mxu0 0.0
    %1497 = vmatprep.subr.mxu0 0.0
    %1498 = vmatpush1.msra.mxu0 0.0
    %1499 = vmatprep.subr.mxu0 0.0
    %1500 = vmatpush1.msra.mxu0 0.0
    %1501 = vmatprep.subr.mxu0 0.0
    %1502 = vmatpush1.msra.mxu0 0.0
    %1503 = vmatprep.subr.mxu0 0.0
    %1504 = vmatpush1.msra.mxu0 0.0
    %1505 = vmatprep.subr.mxu0 0.0
    %1506 = vmatpush1.msra.mxu0 0.0
    %1507 = vmatprep.subr.mxu0 0.0
    %1508 = vmatpush1.msra.mxu0 0.0
    %1509 = vmatprep.mubr.f32.mxu0 0.0
    %1510 = vmatmul.mubr.f32.gmra.mrb[0].mxu0 %v1443
    %v1511 = vpop.f32.mrb[0].mxu0
    %v1512 = vadd.f32 0.0, %v1511
    %v1513 = vpop.f32.mrb[0].mxu0
    %1514 = vdwg.mxu0
    %v1515 = vrcp.pop %v1359
    %v1516 = vrcp.pop %v1362
    %v1517 = vmul.f32 %v1436, %v1515
    %v1518 = vmul.f32 %v1512, %v1516
    %1521 = vrot.lane.b32.xlu0 %v1517, 24
    %v1522 = vpop.permute.xlu0 %1521
    %1523 = vrot.lane.b32.xlu0 %v1518, 24
    %v1524 = vpop.permute.xlu0 %1523
    %vm1527 = vcmask 261312
    %1528 = vst.msk [vmem:[#allocation2] sm:$0xff] %vm1527, %v1522
    %1529 = vst.msk [vmem:[#allocation2 + $0x8] sm:$0xff] %vm1527, %v1524
    %v1530 = vld [vmem:[#allocation2] sm:$0xff]
    %v1531 = vld [vmem:[#allocation2 + $0x8] sm:$0xff]
    %v1532 = vld [vmem:[%s4] sm:$0xff]
    %v1533 = vld [vmem:[%s4 + $0x8] sm:$0xff]
    %v1534 = vld [vmem:[%s4 + $0x10] sm:$0xff]
    %v1535 = vld [vmem:[%s4 + $0x18] sm:$0xff]
    %v1537 = vsel %vm46, %v1530, 0
    %v1540 = vsel %vm46, %v1531, 0
    %1542 = vmatprep.subr.mxu0 0.0
    %1543 = vmatpush1.msra.mxu0 %v1532
    %1544 = vmatprep.subr.mxu0 0.0
    %1545 = vmatpush1.msra.mxu0 %v1533
    %1546 = vmatprep.subr.mxu0 0.0
    %1547 = vmatpush1.msra.mxu0 %v1534
    %1548 = vmatprep.subr.mxu0 0.0
    %1549 = vmatpush1.msra.mxu0 %v1535
    %1550 = vmatprep.subr.mxu0 0.0
    %1551 = vmatpush1.msra.mxu0 0.0
    %1552 = vmatprep.subr.mxu0 0.0
    %1553 = vmatpush1.msra.mxu0 0.0
    %1554 = vmatprep.subr.mxu0 0.0
    %1555 = vmatpush1.msra.mxu0 0.0
    %1556 = vmatprep.subr.mxu0 0.0
    %1557 = vmatpush1.msra.mxu0 0.0
    %1558 = vmatprep.subr.mxu0 0.0
    %1559 = vmatpush1.msra.mxu0 0.0
    %1560 = vmatprep.subr.mxu0 0.0
    %1561 = vmatpush1.msra.mxu0 0.0
    %1562 = vmatprep.subr.mxu0 0.0
    %1563 = vmatpush1.msra.mxu0 0.0
    %1564 = vmatprep.subr.mxu0 0.0
    %1565 = vmatpush1.msra.mxu0 0.0
    %1566 = vmatprep.subr.mxu0 0.0
    %1567 = vmatpush1.msra.mxu0 0.0
    %1568 = vmatprep.subr.mxu0 0.0
    %1569 = vmatpush1.msra.mxu0 0.0
    %1570 = vmatprep.subr.mxu0 0.0
    %1571 = vmatpush1.msra.mxu0 0.0
    %1572 = vmatprep.subr.mxu0 0.0
    %1573 = vmatpush1.msra.mxu0 0.0
    %1574 = vmatprep.subr.mxu0 0.0
    %1575 = vmatpush1.msra.mxu0 0.0
    %1576 = vmatprep.subr.mxu0 0.0
    %1577 = vmatpush1.msra.mxu0 0.0
    %1578 = vmatprep.subr.mxu0 0.0
    %1579 = vmatpush1.msra.mxu0 0.0
    %1580 = vmatprep.subr.mxu0 0.0
    %1581 = vmatpush1.msra.mxu0 0.0
    %1582 = vmatprep.subr.mxu0 0.0
    %1583 = vmatpush1.msra.mxu0 0.0
    %1584 = vmatprep.subr.mxu0 0.0
    %1585 = vmatpush1.msra.mxu0 0.0
    %1586 = vmatprep.subr.mxu0 0.0
    %1587 = vmatpush1.msra.mxu0 0.0
    %1588 = vmatprep.subr.mxu0 0.0
    %1589 = vmatpush1.msra.mxu0 0.0
    %1590 = vmatprep.subr.mxu0 0.0
    %1591 = vmatpush1.msra.mxu0 0.0
    %1592 = vmatprep.subr.mxu0 0.0
    %1593 = vmatpush1.msra.mxu0 0.0
    %1594 = vmatprep.subr.mxu0 0.0
    %1595 = vmatpush1.msra.mxu0 0.0
    %1596 = vmatprep.subr.mxu0 0.0
    %1597 = vmatpush1.msra.mxu0 0.0
    %1598 = vmatprep.subr.mxu0 0.0
    %1599 = vmatpush1.msra.mxu0 0.0
    %1600 = vmatprep.subr.mxu0 0.0
    %1601 = vmatpush1.msra.mxu0 0.0
    %1602 = vmatprep.subr.mxu0 0.0
    %1603 = vmatpush1.msra.mxu0 0.0
    %1604 = vmatprep.subr.mxu0 0.0
    %1605 = vmatpush1.msra.mxu0 0.0
    %1606 = vmatprep.mubr.f32.mxu0 0.0
    %1607 = vmatmul.mubr.f32.gmra.mrb[0].mxu0 %v1537
    %v1608 = vpop.f32.mrb[0].mxu0
    %v1609 = vadd.f32 0.0, %v1608
    %v1610 = vpop.f32.mrb[0].mxu0
    %1611 = vmatprep.mubr.f32.mxu0 0.0
    %1612 = vmatmul.mubr.f32.gmra.mrb[0].mxu0 %v1540
    %v1613 = vpop.f32.mrb[0].mxu0
    %v1614 = vadd.f32 0.0, %v1613
    %v1615 = vpop.f32.mrb[0].mxu0
    %1616 = vdwg.mxu0
    %v1617 = vadd.f32 %v88, %v1609
    %v1618 = vadd.f32 %v89, %v1614
    %v1619 = vld [vmem:[%s5] sm:$0x1]
    %v1620 = vld [vmem:[%s6] sm:$0x1]
    %v1621 = vsel %vm46, %v1617, 0.0
    %1622 = vadd.xlane.f32.xlu0 %v1621
    %v1623 = vpop.xlane.xlu0 %1622
    %v1624 = vsel %vm46, %v1618, 0.0
    %1625 = vadd.xlane.f32.xlu0 %v1624
    %v1626 = vpop.xlane.xlu0 %1625
    %v1627 = vmul.f32 %v1623, %v53
    %v1628 = vmul.f32 %v1626, %v53
    %v1629 = vsub.f32 %v1617, %v1627
    %v1630 = vsub.f32 %v1618, %v1628
    %v1631 = vmul.f32 %v1629, %v1629
    %v1632 = vmul.f32 %v1630, %v1630
    %v1633 = vsel %vm46, %v1631, 0.0
    %1634 = vadd.xlane.f32.xlu0 %v1633
    %v1635 = vpop.xlane.xlu0 %1634
    %v1636 = vsel %vm46, %v1632, 0.0
    %1637 = vadd.xlane.f32.xlu0 %v1636
    %v1638 = vpop.xlane.xlu0 %1637
    %v1639 = vmul.f32 %v1635, %v53
    %v1640 = vmul.f32 %v1638, %v53
    %v1641 = vadd.f32 %v1639, 1e-05
    %v1642 = vadd.f32 %v1640, 1e-05
    %v1643 = vrsqrt.pop %v1641
    %v1644 = vrsqrt.pop %v1642
    %v1645 = vmul.f32 %v1629, %v1643
    %v1646 = vmul.f32 %v1630, %v1644
    %v1648 = vlaneseq
    %v1649 = vshrl.u32 %v1648, 7
    %v1650 = vsub.s32 0, %v1649
    %v1651 = vrot.slane %v1619, %v1650
    %v1653 = vmul.f32 %v1645, %v1651
    %v1654 = vmul.f32 %v1646, %v1651
    %v1656 = vlaneseq
    %v1657 = vshrl.u32 %v1656, 7
    %v1658 = vsub.s32 0, %v1657
    %v1659 = vrot.slane %v1620, %v1658
    %v1661 = vadd.f32 %v1653, %v1659
    %v1662 = vadd.f32 %v1654, %v1659
    %v1663 = vld [vmem:[%s7] sm:$0xff]
    %v1664 = vld [vmem:[%s7 + $0x8] sm:$0xff]
    %v1665 = vld [vmem:[%s7 + $0x10] sm:$0xff]
    %v1666 = vld [vmem:[%s7 + $0x18] sm:$0xff]
    %v1667 = vld [vmem:[%s8] sm:$0x1]
    %v1669 = vlaneseq
    %v1670 = vshrl.u32 %v1669, 7
    %v1671 = vsub.s32 0, %v1670
    %v1672 = vrot.slane %v1667, %v1671
    %v1675 = vsel %vm46, %v1661, 0
    %v1678 = vsel %vm46, %v1662, 0
    %1680 = vmatprep.subr.mxu0 0.0
    %1681 = vmatpush1.msra.mxu0 %v1663
    %1682 = vmatprep.subr.mxu0 0.0
    %1683 = vmatpush1.msra.mxu0 %v1664
    %1684 = vmatprep.subr.mxu0 0.0
    %1685 = vmatpush1.msra.mxu0 %v1665
    %1686 = vmatprep.subr.mxu0 0.0
    %1687 = vmatpush1.msra.mxu0 %v1666
    %1688 = vmatprep.subr.mxu0 0.0
    %1689 = vmatpush1.msra.mxu0 0.0
    %1690 = vmatprep.subr.mxu0 0.0
    %1691 = vmatpush1.msra.mxu0 0.0
    %1692 = vmatprep.subr.mxu0 0.0
    %1693 = vmatpush1.msra.mxu0 0.0
    %1694 = vmatprep.subr.mxu0 0.0
    %1695 = vmatpush1.msra.mxu0 0.0
    %1696 = vmatprep.subr.mxu0 0.0
    %1697 = vmatpush1.msra.mxu0 0.0
    %1698 = vmatprep.subr.mxu0 0.0
    %1699 = vmatpush1.msra.mxu0 0.0
    %1700 = vmatprep.subr.mxu0 0.0
    %1701 = vmatpush1.msra.mxu0 0.0
    %1702 = vmatprep.subr.mxu0 0.0
    %1703 = vmatpush1.msra.mxu0 0.0
    %1704 = vmatprep.subr.mxu0 0.0
    %1705 = vmatpush1.msra.mxu0 0.0
    %1706 = vmatprep.subr.mxu0 0.0
    %1707 = vmatpush1.msra.mxu0 0.0
    %1708 = vmatprep.subr.mxu0 0.0
    %1709 = vmatpush1.msra.mxu0 0.0
    %1710 = vmatprep.subr.mxu0 0.0
    %1711 = vmatpush1.msra.mxu0 0.0
    %1712 = vmatprep.subr.mxu0 0.0
    %1713 = vmatpush1.msra.mxu0 0.0
    %1714 = vmatprep.subr.mxu0 0.0
    %1715 = vmatpush1.msra.mxu0 0.0
    %1716 = vmatprep.subr.mxu0 0.0
    %1717 = vmatpush1.msra.mxu0 0.0
    %1718 = vmatprep.subr.mxu0 0.0
    %1719 = vmatpush1.msra.mxu0 0.0
    %1720 = vmatprep.subr.mxu0 0.0
    %1721 = vmatpush1.msra.mxu0 0.0
    %1722 = vmatprep.subr.mxu0 0.0
    %1723 = vmatpush1.msra.mxu0 0.0
    %1724 = vmatprep.subr.mxu0 0.0
    %1725 = vmatpush1.msra.mxu0 0.0
    %1726 = vmatprep.subr.mxu0 0.0
    %1727 = vmatpush1.msra.mxu0 0.0
    %1728 = vmatprep.subr.mxu0 0.0
    %1729 = vmatpush1.msra.mxu0 0.0
    %1730 = vmatprep.subr.mxu0 0.0
    %1731 = vmatpush1.msra.mxu0 0.0
    %1732 = vmatprep.subr.mxu0 0.0
    %1733 = vmatpush1.msra.mxu0 0.0
    %1734 = vmatprep.subr.mxu0 0.0
    %1735 = vmatpush1.msra.mxu0 0.0
    %1736 = vmatprep.subr.mxu0 0.0
    %1737 = vmatpush1.msra.mxu0 0.0
    %1738 = vmatprep.subr.mxu0 0.0
    %1739 = vmatpush1.msra.mxu0 0.0
    %1740 = vmatprep.subr.mxu0 0.0
    %1741 = vmatpush1.msra.mxu0 0.0
    %1742 = vmatprep.subr.mxu0 0.0
    %1743 = vmatpush1.msra.mxu0 0.0
    %1744 = vmatprep.mubr.f32.mxu0 0.0
    %1745 = vmatmul.mubr.f32.gmra.mrb[0].mxu0 %v1675
    %v1746 = vpop.f32.mrb[0].mxu0
    %v1747 = vadd.f32 %v1672, %v1746
    %v1748 = vpop.f32.mrb[0].mxu0
    %1749 = vmatprep.mubr.f32.mxu0 0.0
    %1750 = vmatmul.mubr.f32.gmra.mrb[0].mxu0 %v1678
    %v1751 = vpop.f32.mrb[0].mxu0
    %v1752 = vadd.f32 %v1672, %v1751
    %v1753 = vpop.f32.mrb[0].mxu0
    %1754 = vdwg.mxu0
    %v1755 = vmul.f32 %v1747, %v1747
    %v1756 = vmul.f32 %v1752, %v1752
    %v1757 = vmul.f32 %v1747, %v1755
    %v1758 = vmul.f32 %v1752, %v1756
    %v1759 = vmul.f32 %v1757, 0.044715
    %v1760 = vmul.f32 %v1758, 0.044715
    %v1761 = vadd.f32 %v1747, %v1759
    %v1762 = vadd.f32 %v1752, %v1760
    %v1763 = vmul.f32 %v1761, 0.7978846
    %v1764 = vmul.f32 %v1762, 0.7978846
    %v1765 = vtanh.pop %v1763
    %v1766 = vtanh.pop %v1764
    %v1767 = vadd.f32 %v1765, 1.0
    %v1768 = vadd.f32 %v1766, 1.0
    %v1769 = vmul.f32 %v1767, 0.5
    %v1770 = vmul.f32 %v1768, 0.5
    %v1771 = vmul.f32 %v1747, %v1769
    %v1772 = vmul.f32 %v1752, %v1770
    %v1773 = vld [vmem:[%s9] sm:$0xff]
    %v1774 = vld [vmem:[%s9 + $0x8] sm:$0xff]
    %v1775 = vld [vmem:[%s9 + $0x10] sm:$0xff]
    %v1776 = vld [vmem:[%s9 + $0x18] sm:$0xff]
    %v1777 = vld [vmem:[%s9 + $0x20] sm:$0xff]
    %v1778 = vld [vmem:[%s9 + $0x28] sm:$0xff]
    %v1779 = vld [vmem:[%s9 + $0x30] sm:$0xff]
    %v1780 = vld [vmem:[%s9 + $0x38] sm:$0xff]
    %v1781 = vld [vmem:[%s9 + $0x40] sm:$0xff]
    %v1782 = vld [vmem:[%s9 + $0x48] sm:$0xff]
    %v1783 = vld [vmem:[%s9 + $0x50] sm:$0xff]
    %v1784 = vld [vmem:[%s9 + $0x58] sm:$0xff]
    %v1785 = vld [vmem:[%s9 + $0x60] sm:$0xff]
    %v1786 = vld [vmem:[%s9 + $0x68] sm:$0xff]
    %v1787 = vld [vmem:[%s9 + $0x70] sm:$0xff]
    %v1788 = vld [vmem:[%s9 + $0x78] sm:$0xff]
    %v1789 = vld [vmem:[%s10] sm:$0x1]
    %v1791 = vlaneseq
    %v1792 = vshrl.u32 %v1791, 7
    %v1793 = vsub.s32 0, %v1792
    %v1794 = vrot.slane %v1789, %v1793
    %1796 = vmatprep.subr.mxu0 0.0
    %1797 = vmatpush1.msra.mxu0 %v1773
    %1798 = vmatprep.subr.mxu0 0.0
    %1799 = vmatpush1.msra.mxu0 %v1774
    %1800 = vmatprep.subr.mxu0 0.0
    %1801 = vmatpush1.msra.mxu0 %v1775
    %1802 = vmatprep.subr.mxu0 0.0
    %1803 = vmatpush1.msra.mxu0 %v1776
    %1804 = vmatprep.subr.mxu0 0.0
    %1805 = vmatpush1.msra.mxu0 %v1777
    %1806 = vmatprep.subr.mxu0 0.0
    %1807 = vmatpush1.msra.mxu0 %v1778
    %1808 = vmatprep.subr.mxu0 0.0
    %1809 = vmatpush1.msra.mxu0 %v1779
    %1810 = vmatprep.subr.mxu0 0.0
    %1811 = vmatpush1.msra.mxu0 %v1780
    %1812 = vmatprep.subr.mxu0 0.0
    %1813 = vmatpush1.msra.mxu0 %v1781
    %1814 = vmatprep.subr.mxu0 0.0
    %1815 = vmatpush1.msra.mxu0 %v1782
    %1816 = vmatprep.subr.mxu0 0.0
    %1817 = vmatpush1.msra.mxu0 %v1783
    %1818 = vmatprep.subr.mxu0 0.0
    %1819 = vmatpush1.msra.mxu0 %v1784
    %1820 = vmatprep.subr.mxu0 0.0
    %1821 = vmatpush1.msra.mxu0 %v1785
    %1822 = vmatprep.subr.mxu0 0.0
    %1823 = vmatpush1.msra.mxu0 %v1786
    %1824 = vmatprep.subr.mxu0 0.0
    %1825 = vmatpush1.msra.mxu0 %v1787
    %1826 = vmatprep.subr.mxu0 0.0
    %1827 = vmatpush1.msra.mxu0 %v1788
    %1828 = vmatprep.subr.mxu0 0.0
    %1829 = vmatpush1.msra.mxu0 0.0
    %1830 = vmatprep.subr.mxu0 0.0
    %1831 = vmatpush1.msra.mxu0 0.0
    %1832 = vmatprep.subr.mxu0 0.0
    %1833 = vmatpush1.msra.mxu0 0.0
    %1834 = vmatprep.subr.mxu0 0.0
    %1835 = vmatpush1.msra.mxu0 0.0
    %1836 = vmatprep.subr.mxu0 0.0
    %1837 = vmatpush1.msra.mxu0 0.0
    %1838 = vmatprep.subr.mxu0 0.0
    %1839 = vmatpush1.msra.mxu0 0.0
    %1840 = vmatprep.subr.mxu0 0.0
    %1841 = vmatpush1.msra.mxu0 0.0
    %1842 = vmatprep.subr.mxu0 0.0
    %1843 = vmatpush1.msra.mxu0 0.0
    %1844 = vmatprep.subr.mxu0 0.0
    %1845 = vmatpush1.msra.mxu0 0.0
    %1846 = vmatprep.subr.mxu0 0.0
    %1847 = vmatpush1.msra.mxu0 0.0
    %1848 = vmatprep.subr.mxu0 0.0
    %1849 = vmatpush1.msra.mxu0 0.0
    %1850 = vmatprep.subr.mxu0 0.0
    %1851 = vmatpush1.msra.mxu0 0.0
    %1852 = vmatprep.subr.mxu0 0.0
    %1853 = vmatpush1.msra.mxu0 0.0
    %1854 = vmatprep.subr.mxu0 0.0
    %1855 = vmatpush1.msra.mxu0 0.0
    %1856 = vmatprep.subr.mxu0 0.0
    %1857 = vmatpush1.msra.mxu0 0.0
    %1858 = vmatprep.subr.mxu0 0.0
    %1859 = vmatpush1.msra.mxu0 0.0
    %1860 = vmatprep.mubr.f32.mxu0 0.0
    %1861 = vmatmul.mubr.f32.gmra.mrb[0].mxu0 %v1771
    %v1862 = vpop.f32.mrb[0].mxu0
    %v1863 = vadd.f32 %v1794, %v1862
    %v1864 = vpop.f32.mrb[0].mxu0
    %1865 = vmatprep.mubr.f32.mxu0 0.0
    %1866 = vmatmul.mubr.f32.gmra.mrb[0].mxu0 %v1772
    %v1867 = vpop.f32.mrb[0].mxu0
    %v1868 = vadd.f32 %v1794, %v1867
    %v1869 = vpop.f32.mrb[0].mxu0
    %1870 = vdwg.mxu0
    %v1871 = vadd.f32 %v1863, %v1661
    %v1872 = vadd.f32 %v1868, %v1662
    %1873 = vst.msk [vmem:[#allocation3] sm:$0xff] %vm46, %v1871
    %1874 = vst.msk [vmem:[#allocation3 + $0x8] sm:$0xff] %vm46, %v1872
    // Predicated region
    $region50: #{tpu_custom_call.1} parent=1 // pred_check
      _
    $region51: #{tpu_custom_call.1} parent=1 // pred_check_branch
      %1876 = sbr.rel (0) target = $region53
    $region52: #{tpu_custom_call.1} parent=1 // pred_region
      %s1878 = ssub.s32 256, 256
      %1879 = vsyncadd [#allocation4], %s1878
      %s1880 = sshll.u32 [#allocation3], 4
      %s1881 = int_to_ptr.vmem [resolvable:$true] %s1880
      %1886 = dma.vmem_to_hbm [thread:$0]  %s1881, 256, %s12, [#allocation4], 128, 128, 8
    $region53: #{tpu_custom_call.1} parent=1 // pred_fallthru
      _
    // Predicated region
    $region54: #{tpu_custom_call.1} parent=1 // pred_check
      _
    $region55: #{tpu_custom_call.1} parent=1 // pred_check_branch
      %1888 = sbr.rel (0) target = $region57
    $region56: #{tpu_custom_call.1} parent=1 // pred_region
      %1889 = dma.done [#allocation4], 256
    $region57: #{tpu_custom_call.1} parent=1 // pred_fallthru
      _
    %1890 = vsyncpa [#allocation4], 1

</llo_original>
